<compile_context>
chip_gen: v6e
topology: v6e:2x2x1
jax: 0.10.0
libtpu: 0.0.40
codegen_flags: <defaults>
</compile_context>

<pallas_src>
import functools
import math

import numpy as np
import jax
import jax.numpy as jnp
from jax import lax
from jax.experimental import pallas as pl
from jax.experimental.pallas import tpu as pltpu

C_PAD = 16      # padded channel width (max channel count in the net, multiple of 8/16)
K = 5           # conv taps
HALO = K // 2   # per-batch zero-halo width == conv padding (must be >= max |tap offset|)
N_LAYERS = 4

assert HALO == 2 and K == 2 * HALO + 1, "halo layout assumes symmetric taps of width K//2"


def _leaky_relu(x):
    return jnp.where(x > 0, x, 0.01 * x)


# ----------------------------- Pallas kernel ---------------------------------

def _conv1d_small_kernel(x_ref, valid_ref, w_ref, out_ref, im2col_ref):
    # x_ref:      (C_PAD, N)           f32; halo/tail lanes and rows >= Cin0 are zero
    # valid_ref:  (1, N)               f32; 1 on valid lanes, 0 on halo/tail lanes
    # w_ref:      (4, C_PAD, K*C_PAD)  bf16 im2col-flattened, zero-padded weights
    # out_ref:    (1, N)               f32 (lane-dense, unmasked vst)
    # im2col_ref: (K*C_PAD, N)         bf16 VMEM scratch (item 2)
    n_pad = x_ref.shape[1]

    # Hoisted once (JAX does not CSE broadcast_in_dim): single (C_PAD, N) valid mask.
    valid = jnp.broadcast_to(valid_ref[...], (C_PAD, n_pad))

    # Item 9: preload all 4 packed weight tiles (10 KB bf16) before the layer loop.
    w_all = w_ref[...]                                      # (N_LAYERS, C_PAD, K*C_PAD)

    a = x_ref[...]                                          # (C_PAD, N) f32
    for layer in range(N_LAYERS):
        # im2col: roll (f32, XLU) -> cast -> store each tap straight into the bf16
        # scratch.  Rolled values never cross a batch because halo lanes of `a` are 0.
        for k in range(K):
            off = k - HALO
            if off == 0:
                tap = a
            else:
                # tap[c, i] = a[c, i + off] (wraparound lands only on halo/tail lanes)
                tap = pltpu.roll(a, shift=(-off) % n_pad, axis=1)
            im2col_ref[k * C_PAD:(k + 1) * C_PAD, :] = tap.astype(jnp.bfloat16)

        # One (underfilled) MXU matmul per layer: (C_PAD, K*C_PAD) x (K*C_PAD, N),
        # bf16 operands / f32 accumulation.
        y = jnp.dot(w_all[layer], im2col_ref[...],
                    preferred_element_type=jnp.float32)     # (C_PAD, N) f32
        a = _leaky_relu(y)

        # Re-zero halo/tail lanes so the NEXT layer's rolls read genuine zeros.
        # (Skipped after the last layer: those lanes are sliced away in the wrapper.)
        if layer < N_LAYERS - 1:
            a = a * valid

    out_ref[...] = a[0:1, :]                                # final layer has Cout = 1


# ------------------------------- wrapper --------------------------------------

def pack_weights(ws):
    """Weights-only host prep (item 7): call once, reuse across forward calls.

    Produces w_flat[co, k*C_PAD + c] = W[co, c, k], zero-padded to C_PAD channels.
    """
    packed = []
    for w in ws:
        cout, cin, kk = w.shape
        assert kk == K
        wt = jnp.transpose(w, (0, 2, 1))                              # (Cout, K, Cin)
        wt = jnp.pad(wt, ((0, C_PAD - cout), (0, 0), (0, C_PAD - cin)))
        packed.append(wt.reshape(C_PAD, K * C_PAD))
    return jnp.stack(packed, axis=0).astype(jnp.bfloat16)             # (4, C_PAD, K*C_PAD)


@jax.jit
def conv1d_small_pallas(x, w_packed):
    """x: (B, Cin, L) float32.  w_packed: output of pack_weights(ws)."""
    B, cin0, L = x.shape
    LPH = L + 2 * HALO                                   # per-batch lanes incl. halo
    n_lanes = B * LPH
    n_pad = ((n_lanes + 127) // 128) * 128               # lane-dense output

    # Halo layout (item 8): channels on sublanes, [2 zeros | L valid | 2 zeros] per batch
    # on lanes.  Halo + tail lanes are zero so layer-1 rolls already read real zeros.
    x_h = jnp.pad(x.astype(jnp.float32), ((0, 0), (0, 0), (HALO, HALO)))   # (B, Cin, L+4)
    x_cf = jnp.transpose(x_h, (1, 0, 2)).reshape(cin0, n_lanes)
    x_pad = jnp.zeros((C_PAD, n_pad), jnp.float32).at[:cin0, :n_lanes].set(x_cf)

    # Valid-lane row: compile-time numpy constant (no per-call XLA work, ~4*n_pad bytes DMA).
    lane = np.arange(n_pad, dtype=np.int32)
    pos = lane % LPH
    valid_np = ((pos >= HALO) & (pos < HALO + L) & (lane < n_lanes)).astype(np.float32)
    valid_row = jnp.asarray(valid_np).reshape(1, n_pad)

    vmem = pl.BlockSpec(memory_space=pltpu.MemorySpace.VMEM)
    flops = 2 * N_LAYERS * C_PAD * (K * C_PAD) * n_pad
    bytes_accessed = (C_PAD * n_pad * 4) + (n_pad * 4) + (w_packed.size * 2) + (n_pad * 4)

    out = pl.pallas_call(
        _conv1d_small_kernel,
        out_shape=jax.ShapeDtypeStruct((1, n_pad), jnp.float32),
        in_specs=[vmem, vmem, vmem],
        out_specs=vmem,
        scratch_shapes=[pltpu.VMEM((K * C_PAD, n_pad), jnp.bfloat16)],   # item 2: bf16 im2col
        cost_estimate=pl.CostEstimate(flops=flops, transcendentals=0,
                                      bytes_accessed=bytes_accessed),
    )(x_pad, valid_row, w_packed)

    out_v = out[0, :n_lanes].reshape(B, LPH)[:, HALO:HALO + L]           # drop halo lanes
    return out_v.reshape(B, 1, L)                                        # PyTorch (B, 1, L)


# ---------------------------- pure-JAX reference ------------------------------

def _conv1d_ref(x, w):
    # x: (B, Cin, L), w: (Cout, Cin, 5), stride 1, pad 2, no bias (cross-correlation)
    return lax.conv_general_dilated(
        x, w, window_strides=(1,), padding=[(2, 2)],
        dimension_numbers=("NCH", "OIH", "NCH"),
        precision=lax.Precision.HIGHEST)


def conv1d_small_ref(x, ws):
    for w in ws:
        x = _conv1d_ref(x, w)
        x = jnp.where(x > 0, x, 0.01 * x)
    return x


# ----------------------------------- main -------------------------------------

if __name__ == "__main__":
    B, L = 4, 64
    key = jax.random.PRNGKey(0)
    k_x, k1, k2, k3, k4 = jax.random.split(key, 5)

    x = jax.random.normal(k_x, (B, 1, L), dtype=jnp.float32)

    def init_w(k, cout, cin):
        return jax.random.normal(k, (cout, cin, K), dtype=jnp.float32) / math.sqrt(cin * K)

    ws = [init_w(k1, 8, 1),
          init_w(k2, 16, 8),
          init_w(k3, 8, 16),
          init_w(k4, 1, 8)]

    w_packed = pack_weights(ws)          # item 7: weights-only prep, done once

    out = conv1d_small_pallas(x, w_packed)
    jax.block_until_ready(out)

    ref = conv1d_small_ref(x, ws)
    # tolerance sized for bf16 MXU operands (f32 accumulation) through 4 conv layers
    np.testing.assert_allclose(np.asarray(out), np.asarray(ref), rtol=5e-2, atol=3e-2)

    print("KERNEL_OK")
</pallas_src>

<mosaic_0001>
module attributes {stable_mosaic.version = 11 : i64} {
  func.func @_conv1d_small_kernel(%arg0: memref<16x384xf32, #tpu.memory_space<vmem>>, %arg1: memref<1x384xf32, #tpu.memory_space<vmem>>, %arg2: memref<4x16x80xbf16, #tpu.memory_space<vmem>>, %arg3: memref<1x384xf32, #tpu.memory_space<vmem>>, %arg4: memref<80x384xbf16, #tpu.memory_space<vmem>>) attributes {dimension_semantics = [], scalar_prefetch = 0 : i64, scratch_operands = 1 : i64, tpu.core_type = #tpu.core_type<tc>} {
    %c0 = arith.constant 0 : index
    %c0_0 = arith.constant 0 : index
    %0 = vector.load %arg1[%c0, %c0_0] : memref<1x384xf32, #tpu.memory_space<vmem>>, vector<1x384xf32>
    %1 = vector.shape_cast %0 : vector<1x384xf32> to vector<1x384xf32>
    %2 = vector.broadcast %1 : vector<1x384xf32> to vector<16x384xf32>
    %c0_1 = arith.constant 0 : index
    %c0_2 = arith.constant 0 : index
    %c0_3 = arith.constant 0 : index
    %3 = vector.load %arg2[%c0_1, %c0_2, %c0_3] : memref<4x16x80xbf16, #tpu.memory_space<vmem>>, vector<4x16x80xbf16>
    %c0_4 = arith.constant 0 : index
    %c0_5 = arith.constant 0 : index
    %4 = vector.load %arg0[%c0_4, %c0_5] : memref<16x384xf32, #tpu.memory_space<vmem>>, vector<16x384xf32>
    %c2_i32 = arith.constant 2 : i32
    %5 = tpu.dynamic_rotate %4 by %c2_i32 dim 1 : vector<16x384xf32>, i32 -> vector<16x384xf32>
    %6 = arith.truncf %5 : vector<16x384xf32> to vector<16x384xbf16>
    %c0_6 = arith.constant 0 : index
    %c0_7 = arith.constant 0 : index
    %7 = vector.load %arg4[%c0_6, %c0_7] : memref<80x384xbf16, #tpu.memory_space<vmem>>, vector<16x384xbf16>
    tpu.vector_store %arg4[%c0_6, %c0_7], %6 {strides = array<i32>} : memref<80x384xbf16, #tpu.memory_space<vmem>>, vector<16x384xbf16>,
    %c1_i32 = arith.constant 1 : i32
    %8 = tpu.dynamic_rotate %4 by %c1_i32 dim 1 : vector<16x384xf32>, i32 -> vector<16x384xf32>
    %9 = arith.truncf %8 : vector<16x384xf32> to vector<16x384xbf16>
    %c16 = arith.constant 16 : index
    %c0_8 = arith.constant 0 : index
    %10 = vector.load %arg4[%c16, %c0_8] : memref<80x384xbf16, #tpu.memory_space<vmem>>, vector<16x384xbf16>
    tpu.vector_store %arg4[%c16, %c0_8], %9 {strides = array<i32>} : memref<80x384xbf16, #tpu.memory_space<vmem>>, vector<16x384xbf16>,
    %11 = arith.truncf %4 : vector<16x384xf32> to vector<16x384xbf16>
    %c32 = arith.constant 32 : index
    %c0_9 = arith.constant 0 : index
    %12 = vector.load %arg4[%c32, %c0_9] : memref<80x384xbf16, #tpu.memory_space<vmem>>, vector<16x384xbf16>
    tpu.vector_store %arg4[%c32, %c0_9], %11 {strides = array<i32>} : memref<80x384xbf16, #tpu.memory_space<vmem>>, vector<16x384xbf16>,
    %c383_i32 = arith.constant 383 : i32
    %13 = tpu.dynamic_rotate %4 by %c383_i32 dim 1 : vector<16x384xf32>, i32 -> vector<16x384xf32>
    %14 = arith.truncf %13 : vector<16x384xf32> to vector<16x384xbf16>
    %c48 = arith.constant 48 : index
    %c0_10 = arith.constant 0 : index
    %15 = vector.load %arg4[%c48, %c0_10] : memref<80x384xbf16, #tpu.memory_space<vmem>>, vector<16x384xbf16>
    tpu.vector_store %arg4[%c48, %c0_10], %14 {strides = array<i32>} : memref<80x384xbf16, #tpu.memory_space<vmem>>, vector<16x384xbf16>,
    %c382_i32 = arith.constant 382 : i32
    %16 = tpu.dynamic_rotate %4 by %c382_i32 dim 1 : vector<16x384xf32>, i32 -> vector<16x384xf32>
    %17 = arith.truncf %16 : vector<16x384xf32> to vector<16x384xbf16>
    %c64 = arith.constant 64 : index
    %c0_11 = arith.constant 0 : index
    %18 = vector.load %arg4[%c64, %c0_11] : memref<80x384xbf16, #tpu.memory_space<vmem>>, vector<16x384xbf16>
    tpu.vector_store %arg4[%c64, %c0_11], %17 {strides = array<i32>} : memref<80x384xbf16, #tpu.memory_space<vmem>>, vector<16x384xbf16>,
    %19 = vector.extract_strided_slice %3 {offsets = [0, 0, 0], sizes = [1, 16, 80], strides = [1, 1, 1]} : vector<4x16x80xbf16> to vector<1x16x80xbf16>
    %20 = vector.shape_cast %19 : vector<1x16x80xbf16> to vector<16x80xbf16>
    %c0_12 = arith.constant 0 : index
    %c0_13 = arith.constant 0 : index
    %21 = vector.load %arg4[%c0_12, %c0_13] : memref<80x384xbf16, #tpu.memory_space<vmem>>, vector<80x384xbf16>
    %cst = arith.constant dense<0.000000e+00> : vector<16x384xf32>
    %22 = tpu.matmul %20, %21, %cst {dimension_numbers = #tpu.dot_dimension_numbers<[1], [0], [0], [1], [0, 0, 1, 1], [], []>} : vector<16x80xbf16>, vector<80x384xbf16>, vector<16x384xf32> -> vector<16x384xf32>
    %cst_14 = arith.constant 0.000000e+00 : f32
    %23 = vector.broadcast %cst_14 : f32 to vector<16x384xf32>
    %24 = arith.cmpf ogt, %22, %23 : vector<16x384xf32>
    %cst_15 = arith.constant 0.00999999977 : f32
    %25 = vector.broadcast %cst_15 : f32 to vector<16x384xf32>
    %26 = arith.mulf %25, %22 : vector<16x384xf32>
    %27 = arith.select %24, %22, %26 : vector<16x384xi1>, vector<16x384xf32>
    %28 = arith.mulf %27, %2 : vector<16x384xf32>
    %c2_i32_16 = arith.constant 2 : i32
    %29 = tpu.dynamic_rotate %28 by %c2_i32_16 dim 1 : vector<16x384xf32>, i32 -> vector<16x384xf32>
    %30 = arith.truncf %29 : vector<16x384xf32> to vector<16x384xbf16>
    %c0_17 = arith.constant 0 : index
    %c0_18 = arith.constant 0 : index
    %31 = vector.load %arg4[%c0_17, %c0_18] : memref<80x384xbf16, #tpu.memory_space<vmem>>, vector<16x384xbf16>
    tpu.vector_store %arg4[%c0_17, %c0_18], %30 {strides = array<i32>} : memref<80x384xbf16, #tpu.memory_space<vmem>>, vector<16x384xbf16>,
    %c1_i32_19 = arith.constant 1 : i32
    %32 = tpu.dynamic_rotate %28 by %c1_i32_19 dim 1 : vector<16x384xf32>, i32 -> vector<16x384xf32>
    %33 = arith.truncf %32 : vector<16x384xf32> to vector<16x384xbf16>
    %c16_20 = arith.constant 16 : index
    %c0_21 = arith.constant 0 : index
    %34 = vector.load %arg4[%c16_20, %c0_21] : memref<80x384xbf16, #tpu.memory_space<vmem>>, vector<16x384xbf16>
    tpu.vector_store %arg4[%c16_20, %c0_21], %33 {strides = array<i32>} : memref<80x384xbf16, #tpu.memory_space<vmem>>, vector<16x384xbf16>,
    %35 = arith.truncf %28 : vector<16x384xf32> to vector<16x384xbf16>
    %c32_22 = arith.constant 32 : index
    %c0_23 = arith.constant 0 : index
    %36 = vector.load %arg4[%c32_22, %c0_23] : memref<80x384xbf16, #tpu.memory_space<vmem>>, vector<16x384xbf16>
    tpu.vector_store %arg4[%c32_22, %c0_23], %35 {strides = array<i32>} : memref<80x384xbf16, #tpu.memory_space<vmem>>, vector<16x384xbf16>,
    %c383_i32_24 = arith.constant 383 : i32
    %37 = tpu.dynamic_rotate %28 by %c383_i32_24 dim 1 : vector<16x384xf32>, i32 -> vector<16x384xf32>
    %38 = arith.truncf %37 : vector<16x384xf32> to vector<16x384xbf16>
    %c48_25 = arith.constant 48 : index
    %c0_26 = arith.constant 0 : index
    %39 = vector.load %arg4[%c48_25, %c0_26] : memref<80x384xbf16, #tpu.memory_space<vmem>>, vector<16x384xbf16>
    tpu.vector_store %arg4[%c48_25, %c0_26], %38 {strides = array<i32>} : memref<80x384xbf16, #tpu.memory_space<vmem>>, vector<16x384xbf16>,
    %c382_i32_27 = arith.constant 382 : i32
    %40 = tpu.dynamic_rotate %28 by %c382_i32_27 dim 1 : vector<16x384xf32>, i32 -> vector<16x384xf32>
    %41 = arith.truncf %40 : vector<16x384xf32> to vector<16x384xbf16>
    %c64_28 = arith.constant 64 : index
    %c0_29 = arith.constant 0 : index
    %42 = vector.load %arg4[%c64_28, %c0_29] : memref<80x384xbf16, #tpu.memory_space<vmem>>, vector<16x384xbf16>
    tpu.vector_store %arg4[%c64_28, %c0_29], %41 {strides = array<i32>} : memref<80x384xbf16, #tpu.memory_space<vmem>>, vector<16x384xbf16>,
    %43 = vector.extract_strided_slice %3 {offsets = [1, 0, 0], sizes = [1, 16, 80], strides = [1, 1, 1]} : vector<4x16x80xbf16> to vector<1x16x80xbf16>
    %44 = vector.shape_cast %43 : vector<1x16x80xbf16> to vector<16x80xbf16>
    %c0_30 = arith.constant 0 : index
    %c0_31 = arith.constant 0 : index
    %45 = vector.load %arg4[%c0_30, %c0_31] : memref<80x384xbf16, #tpu.memory_space<vmem>>, vector<80x384xbf16>
    %cst_32 = arith.constant dense<0.000000e+00> : vector<16x384xf32>
    %46 = tpu.matmul %44, %45, %cst_32 {dimension_numbers = #tpu.dot_dimension_numbers<[1], [0], [0], [1], [0, 0, 1, 1], [], []>} : vector<16x80xbf16>, vector<80x384xbf16>, vector<16x384xf32> -> vector<16x384xf32>
    %cst_33 = arith.constant 0.000000e+00 : f32
    %47 = vector.broadcast %cst_33 : f32 to vector<16x384xf32>
    %48 = arith.cmpf ogt, %46, %47 : vector<16x384xf32>
    %cst_34 = arith.constant 0.00999999977 : f32
    %49 = vector.broadcast %cst_34 : f32 to vector<16x384xf32>
    %50 = arith.mulf %49, %46 : vector<16x384xf32>
    %51 = arith.select %48, %46, %50 : vector<16x384xi1>, vector<16x384xf32>
    %52 = arith.mulf %51, %2 : vector<16x384xf32>
    %c2_i32_35 = arith.constant 2 : i32
    %53 = tpu.dynamic_rotate %52 by %c2_i32_35 dim 1 : vector<16x384xf32>, i32 -> vector<16x384xf32>
    %54 = arith.truncf %53 : vector<16x384xf32> to vector<16x384xbf16>
    %c0_36 = arith.constant 0 : index
    %c0_37 = arith.constant 0 : index
    %55 = vector.load %arg4[%c0_36, %c0_37] : memref<80x384xbf16, #tpu.memory_space<vmem>>, vector<16x384xbf16>
    tpu.vector_store %arg4[%c0_36, %c0_37], %54 {strides = array<i32>} : memref<80x384xbf16, #tpu.memory_space<vmem>>, vector<16x384xbf16>,
    %c1_i32_38 = arith.constant 1 : i32
    %56 = tpu.dynamic_rotate %52 by %c1_i32_38 dim 1 : vector<16x384xf32>, i32 -> vector<16x384xf32>
    %57 = arith.truncf %56 : vector<16x384xf32> to vector<16x384xbf16>
    %c16_39 = arith.constant 16 : index
    %c0_40 = arith.constant 0 : index
    %58 = vector.load %arg4[%c16_39, %c0_40] : memref<80x384xbf16, #tpu.memory_space<vmem>>, vector<16x384xbf16>
    tpu.vector_store %arg4[%c16_39, %c0_40], %57 {strides = array<i32>} : memref<80x384xbf16, #tpu.memory_space<vmem>>, vector<16x384xbf16>,
    %59 = arith.truncf %52 : vector<16x384xf32> to vector<16x384xbf16>
    %c32_41 = arith.constant 32 : index
    %c0_42 = arith.constant 0 : index
    %60 = vector.load %arg4[%c32_41, %c0_42] : memref<80x384xbf16, #tpu.memory_space<vmem>>, vector<16x384xbf16>
    tpu.vector_store %arg4[%c32_41, %c0_42], %59 {strides = array<i32>} : memref<80x384xbf16, #tpu.memory_space<vmem>>, vector<16x384xbf16>,
    %c383_i32_43 = arith.constant 383 : i32
    %61 = tpu.dynamic_rotate %52 by %c383_i32_43 dim 1 : vector<16x384xf32>, i32 -> vector<16x384xf32>
    %62 = arith.truncf %61 : vector<16x384xf32> to vector<16x384xbf16>
    %c48_44 = arith.constant 48 : index
    %c0_45 = arith.constant 0 : index
    %63 = vector.load %arg4[%c48_44, %c0_45] : memref<80x384xbf16, #tpu.memory_space<vmem>>, vector<16x384xbf16>
    tpu.vector_store %arg4[%c48_44, %c0_45], %62 {strides = array<i32>} : memref<80x384xbf16, #tpu.memory_space<vmem>>, vector<16x384xbf16>,
    %c382_i32_46 = arith.constant 382 : i32
    %64 = tpu.dynamic_rotate %52 by %c382_i32_46 dim 1 : vector<16x384xf32>, i32 -> vector<16x384xf32>
    %65 = arith.truncf %64 : vector<16x384xf32> to vector<16x384xbf16>
    %c64_47 = arith.constant 64 : index
    %c0_48 = arith.constant 0 : index
    %66 = vector.load %arg4[%c64_47, %c0_48] : memref<80x384xbf16, #tpu.memory_space<vmem>>, vector<16x384xbf16>
    tpu.vector_store %arg4[%c64_47, %c0_48], %65 {strides = array<i32>} : memref<80x384xbf16, #tpu.memory_space<vmem>>, vector<16x384xbf16>,
    %67 = vector.extract_strided_slice %3 {offsets = [2, 0, 0], sizes = [1, 16, 80], strides = [1, 1, 1]} : vector<4x16x80xbf16> to vector<1x16x80xbf16>
    %68 = vector.shape_cast %67 : vector<1x16x80xbf16> to vector<16x80xbf16>
    %c0_49 = arith.constant 0 : index
    %c0_50 = arith.constant 0 : index
    %69 = vector.load %arg4[%c0_49, %c0_50] : memref<80x384xbf16, #tpu.memory_space<vmem>>, vector<80x384xbf16>
    %cst_51 = arith.constant dense<0.000000e+00> : vector<16x384xf32>
    %70 = tpu.matmul %68, %69, %cst_51 {dimension_numbers = #tpu.dot_dimension_numbers<[1], [0], [0], [1], [0, 0, 1, 1], [], []>} : vector<16x80xbf16>, vector<80x384xbf16>, vector<16x384xf32> -> vector<16x384xf32>
    %cst_52 = arith.constant 0.000000e+00 : f32
    %71 = vector.broadcast %cst_52 : f32 to vector<16x384xf32>
    %72 = arith.cmpf ogt, %70, %71 : vector<16x384xf32>
    %cst_53 = arith.constant 0.00999999977 : f32
    %73 = vector.broadcast %cst_53 : f32 to vector<16x384xf32>
    %74 = arith.mulf %73, %70 : vector<16x384xf32>
    %75 = arith.select %72, %70, %74 : vector<16x384xi1>, vector<16x384xf32>
    %76 = arith.mulf %75, %2 : vector<16x384xf32>
    %c2_i32_54 = arith.constant 2 : i32
    %77 = tpu.dynamic_rotate %76 by %c2_i32_54 dim 1 : vector<16x384xf32>, i32 -> vector<16x384xf32>
    %78 = arith.truncf %77 : vector<16x384xf32> to vector<16x384xbf16>
    %c0_55 = arith.constant 0 : index
    %c0_56 = arith.constant 0 : index
    %79 = vector.load %arg4[%c0_55, %c0_56] : memref<80x384xbf16, #tpu.memory_space<vmem>>, vector<16x384xbf16>
    tpu.vector_store %arg4[%c0_55, %c0_56], %78 {strides = array<i32>} : memref<80x384xbf16, #tpu.memory_space<vmem>>, vector<16x384xbf16>,
    %c1_i32_57 = arith.constant 1 : i32
    %80 = tpu.dynamic_rotate %76 by %c1_i32_57 dim 1 : vector<16x384xf32>, i32 -> vector<16x384xf32>
    %81 = arith.truncf %80 : vector<16x384xf32> to vector<16x384xbf16>
    %c16_58 = arith.constant 16 : index
    %c0_59 = arith.constant 0 : index
    %82 = vector.load %arg4[%c16_58, %c0_59] : memref<80x384xbf16, #tpu.memory_space<vmem>>, vector<16x384xbf16>
    tpu.vector_store %arg4[%c16_58, %c0_59], %81 {strides = array<i32>} : memref<80x384xbf16, #tpu.memory_space<vmem>>, vector<16x384xbf16>,
    %83 = arith.truncf %76 : vector<16x384xf32> to vector<16x384xbf16>
    %c32_60 = arith.constant 32 : index
    %c0_61 = arith.constant 0 : index
    %84 = vector.load %arg4[%c32_60, %c0_61] : memref<80x384xbf16, #tpu.memory_space<vmem>>, vector<16x384xbf16>
    tpu.vector_store %arg4[%c32_60, %c0_61], %83 {strides = array<i32>} : memref<80x384xbf16, #tpu.memory_space<vmem>>, vector<16x384xbf16>,
    %c383_i32_62 = arith.constant 383 : i32
    %85 = tpu.dynamic_rotate %76 by %c383_i32_62 dim 1 : vector<16x384xf32>, i32 -> vector<16x384xf32>
    %86 = arith.truncf %85 : vector<16x384xf32> to vector<16x384xbf16>
    %c48_63 = arith.constant 48 : index
    %c0_64 = arith.constant 0 : index
    %87 = vector.load %arg4[%c48_63, %c0_64] : memref<80x384xbf16, #tpu.memory_space<vmem>>, vector<16x384xbf16>
    tpu.vector_store %arg4[%c48_63, %c0_64], %86 {strides = array<i32>} : memref<80x384xbf16, #tpu.memory_space<vmem>>, vector<16x384xbf16>,
    %c382_i32_65 = arith.constant 382 : i32
    %88 = tpu.dynamic_rotate %76 by %c382_i32_65 dim 1 : vector<16x384xf32>, i32 -> vector<16x384xf32>
    %89 = arith.truncf %88 : vector<16x384xf32> to vector<16x384xbf16>
    %c64_66 = arith.constant 64 : index
    %c0_67 = arith.constant 0 : index
    %90 = vector.load %arg4[%c64_66, %c0_67] : memref<80x384xbf16, #tpu.memory_space<vmem>>, vector<16x384xbf16>
    tpu.vector_store %arg4[%c64_66, %c0_67], %89 {strides = array<i32>} : memref<80x384xbf16, #tpu.memory_space<vmem>>, vector<16x384xbf16>,
    %91 = vector.extract_strided_slice %3 {offsets = [3, 0, 0], sizes = [1, 16, 80], strides = [1, 1, 1]} : vector<4x16x80xbf16> to vector<1x16x80xbf16>
    %92 = vector.shape_cast %91 : vector<1x16x80xbf16> to vector<16x80xbf16>
    %c0_68 = arith.constant 0 : index
    %c0_69 = arith.constant 0 : index
    %93 = vector.load %arg4[%c0_68, %c0_69] : memref<80x384xbf16, #tpu.memory_space<vmem>>, vector<80x384xbf16>
    %cst_70 = arith.constant dense<0.000000e+00> : vector<16x384xf32>
    %94 = tpu.matmul %92, %93, %cst_70 {dimension_numbers = #tpu.dot_dimension_numbers<[1], [0], [0], [1], [0, 0, 1, 1], [], []>} : vector<16x80xbf16>, vector<80x384xbf16>, vector<16x384xf32> -> vector<16x384xf32>
    %cst_71 = arith.constant 0.000000e+00 : f32
    %95 = vector.broadcast %cst_71 : f32 to vector<16x384xf32>
    %96 = arith.cmpf ogt, %94, %95 : vector<16x384xf32>
    %cst_72 = arith.constant 0.00999999977 : f32
    %97 = vector.broadcast %cst_72 : f32 to vector<16x384xf32>
    %98 = arith.mulf %97, %94 : vector<16x384xf32>
    %99 = arith.select %96, %94, %98 : vector<16x384xi1>, vector<16x384xf32>
    %100 = vector.extract_strided_slice %99 {offsets = [0, 0], sizes = [1, 384], strides = [1, 1]} : vector<16x384xf32> to vector<1x384xf32>
    %c0_73 = arith.constant 0 : index
    %c0_74 = arith.constant 0 : index
    %101 = vector.load %arg3[%c0_73, %c0_74] : memref<1x384xf32, #tpu.memory_space<vmem>>, vector<1x384xf32>
    tpu.vector_store %arg3[%c0_73, %c0_74], %100 {strides = array<i32>} : memref<1x384xf32, #tpu.memory_space<vmem>>, vector<1x384xf32>,
    return
  }
}

</mosaic_0001>

<llo_original>
// kernel: squeeze.1
$region0: #{squeeze.1}
  %s0 = inlined_call_operand.vmem [shape: f32[272], index: 0, kind: input, shape index: {}]
  %s1 = inlined_call_operand.vmem [shape: f32[4,68], index: 1, kind: output, shape index: {}]
  $region1: #{squeeze.1} parent=0
    #allocation0 [shape = 'u8[4096]{0}', space=vmem, size = 0x1000, scoped, tag = 'scoped mem for output reshape']
    #allocation1 [shape = 'u8[4096]{0}', space=vmem, size = 0x1000, scoped, tag = 'scoped mem for input reshape']
    %s3 = sshll.u32 1, 4
    %s4 = ssub.s32 %s3, 1
    %v5 = vld [vmem:[%s0] sm:%s4]
    %6 = vst [vmem:[#allocation1] sm:%s4] %v5
    %v7 = vld [vmem:[#allocation1] sm:$0x1]
    %vm8 = vcmask 556032
    %9 = vst.msk [vmem:[#allocation0] sm:$0x1] %vm8, %v7
    %s10 = scalar_lea.vmem [#allocation1], 1
    %v11 = vld [vmem:[%s10] sm:$0x1]
    %12 = vrot.lane.b32.xlu0 %v11, 120
    %v13 = vpop.permute.xlu0 %12
    %vm14 = vcmask 556032
    %s15 = scalar_lea.vmem [#allocation0], 2
    %16 = vst.msk [vmem:[%s15] sm:$0x1] %vm14, %v13
    %v17 = vld [vmem:[#allocation1] sm:$0x1]
    %s18 = scalar_lea.vmem [#allocation1], 1
    %v19 = vld [vmem:[%s18] sm:$0x1]
    %vm20 = vcmask 556032
    %v21 = vsel %vm20, %v19, %v17
    %22 = vrot.lane.b32.xlu0 %v21, 60
    %v23 = vpop.permute.xlu0 %22
    %vm24 = vcmask 490496
    %s25 = scalar_lea.vmem [#allocation0], 1
    %26 = vst.msk [vmem:[%s25] sm:$0x1] %vm24, %v23
    %vm27 = vcmask 556512
    %s28 = scalar_lea.vmem [#allocation0], 1
    %29 = vst.msk [vmem:[%s28] sm:$0x1] %vm27, %v23
    %s30 = scalar_lea.vmem [#allocation1], 1
    %v31 = vld [vmem:[%s30] sm:$0x1]
    %s32 = scalar_lea.vmem [#allocation1], 2
    %v33 = vld [vmem:[%s32] sm:$0x1]
    %vm34 = vcmask 621568
    %v35 = vsel %vm34, %v33, %v31
    %36 = vrot.lane.b32.xlu0 %v35, 52
    %v37 = vpop.permute.xlu0 %36
    %vm38 = vcmask 424960
    %s39 = scalar_lea.vmem [#allocation0], 3
    %40 = vst.msk [vmem:[%s39] sm:$0x1] %vm38, %v37
    %vm41 = vcmask 556448
    %s42 = scalar_lea.vmem [#allocation0], 3
    %43 = vst.msk [vmem:[%s42] sm:$0x1] %vm41, %v37
    %s45 = sshll.u32 1, 4
    %s46 = ssub.s32 %s45, 1
    %v48 = vld [vmem:[#allocation0] sm:%s46]
    %s49 = sshll.u32 1, 4
    %s50 = ssub.s32 %s49, 1
    %51 = vst [vmem:[%s1] sm:%s50] %v48

// kernel: conv1d_small_pallas.1
$region0: #{conv1d_small_pallas.1}
  #allocation0 [shape = 'u32[]', space=smem, size = 0x4, offset = 0x4, fixed_abs, tag = 'smem constant byte address 0x4 - core index']
  #allocation1 [shape = 'u32[144,128]{1,0:T(1,128)}', space=vmem, size = 0x12000, scoped, tag = 'internal scratch']
  #allocation2 [shape = 'bf16[80,384]{1,0:T(8,128)(2,1)}', space=vmem, size = 0xf000, scoped, tag = 'scratch operand']
  %s0 = inlined_call_operand.vmem [shape: f32[16,384], index: 0, kind: input, shape index: {}]
  %s1 = inlined_call_operand.vmem [shape: f32[1,384], index: 1, kind: input, shape index: {}]
  %s2 = inlined_call_operand.vmem [shape: bf16[4,16,80], index: 2, kind: input, shape index: {}]
  %s3 = inlined_call_operand.vmem [shape: f32[1,384], index: 3, kind: output, shape index: {}]
  %s4 = sld [smem:[#allocation0]]
  $region22: #{conv1d_small_pallas.1} parent=0
    _
  %s6 = ssub.s32 1, %s4
  %s7 = scalar_select 0, %s6, %s4
  // Predicated region
  $region2: #{conv1d_small_pallas.1} parent=0 // pred_check
    _
  $region3: #{conv1d_small_pallas.1} parent=0 // pred_check_branch
    %9 = sbr.rel (0) target = $region5
  $region4: #{conv1d_small_pallas.1} parent=0 // pred_region
    _
  $region5: #{conv1d_small_pallas.1} parent=0 // pred_fallthru
    _
  // Predicated region
  $region6: #{conv1d_small_pallas.1} parent=0 // pred_check
    _
  $region7: #{conv1d_small_pallas.1} parent=0 // pred_check_branch
    %11 = sbr.rel (0) target = $region9
  $region8: #{conv1d_small_pallas.1} parent=0 // pred_region
    _
  $region9: #{conv1d_small_pallas.1} parent=0 // pred_fallthru
    _
  // Predicated region
  $region10: #{conv1d_small_pallas.1} parent=0 // pred_check
    _
  $region11: #{conv1d_small_pallas.1} parent=0 // pred_check_branch
    %13 = sbr.rel (0) target = $region13
  $region12: #{conv1d_small_pallas.1} parent=0 // pred_region
    _
  $region13: #{conv1d_small_pallas.1} parent=0 // pred_fallthru
    _
  %v15 = vld [vmem:[%s1] sm:$0x7]
  %v17 = vlaneseq
  %v18 = vshrl.u32 %v17, 7
  %v19 = vsub.s32 0, %v18
  %v20 = vrot.slane %v15, %v19
  %v21 = vlaneseq
  %v22 = vshrl.u32 %v21, 7
  %v23 = vsub.s32 1, %v22
  %v24 = vrot.slane %v15, %v23
  %v25 = vlaneseq
  %v26 = vshrl.u32 %v25, 7
  %v27 = vsub.s32 2, %v26
  %v28 = vrot.slane %v15, %v27
  %v32 = vld [vmem:[%s2] sm:$0xf]
  %v33 = vld [vmem:[%s2 + $0x4] sm:$0xf]
  %v34 = vld [vmem:[%s2 + $0x8] sm:$0xf]
  %v35 = vld [vmem:[%s2 + $0xc] sm:$0xf]
  %v36 = vld [vmem:[%s2 + $0x10] sm:$0xf]
  %v37 = vld [vmem:[%s2 + $0x14] sm:$0xf]
  %v38 = vld [vmem:[%s2 + $0x18] sm:$0xf]
  %v39 = vld [vmem:[%s2 + $0x1c] sm:$0xf]
  %v40 = vld [vmem:[%s0] sm:$0xff]
  %v41 = vld [vmem:[%s0 + $0x8] sm:$0xff]
  %v42 = vld [vmem:[%s0 + $0x10] sm:$0xff]
  %v43 = vld [vmem:[%s0 + $0x18] sm:$0xff]
  %v44 = vld [vmem:[%s0 + $0x20] sm:$0xff]
  %v45 = vld [vmem:[%s0 + $0x28] sm:$0xff]
  %46 = vrot.lane.b32.xlu0 %v40, 2
  %v47 = vpop.permute.xlu0 %46
  %48 = vrot.lane.b32.xlu0 %v43, 2
  %v49 = vpop.permute.xlu0 %48
  %50 = vrot.lane.b32.xlu0 %v41, 2
  %v51 = vpop.permute.xlu0 %50
  %52 = vrot.lane.b32.xlu0 %v44, 2
  %v53 = vpop.permute.xlu0 %52
  %54 = vrot.lane.b32.xlu0 %v42, 2
  %v55 = vpop.permute.xlu0 %54
  %56 = vrot.lane.b32.xlu0 %v45, 2
  %v57 = vpop.permute.xlu0 %56
  %v58 = vlaneseq
  %v59 = vand.u32 %v58, 127
  %vm60 = vcmp.lt.s32.totalorder %v59, 2
  %v61 = vsel %vm60, %v51, %v55
  %v62 = vsel %vm60, %v53, %v57
  %v63 = vsel %vm60, %v47, %v51
  %v64 = vsel %vm60, %v49, %v53
  %v65 = vsel %vm60, %v55, %v47
  %v66 = vsel %vm60, %v57, %v49
  %v67 = vpack.c.bf16 %v66, %v65
  %v68 = vpack.c.bf16 %v64, %v63
  %v69 = vpack.c.bf16 %v62, %v61
  %v73 = vunpack.c.l.b16 %v67
  %v74 = vunpack.c.l.b16 %v68
  %v75 = vunpack.c.l.b16 %v69
  %v76 = vunpack.c.h.b16 %v67
  %v77 = vunpack.c.h.b16 %v68
  %v78 = vunpack.c.h.b16 %v69
  %v79 = vpack.c.b16 %v74, %v73
  %v80 = vpack.c.b16 %v75, %v75
  %v81 = vpack.c.b16 %v77, %v76
  %v82 = vpack.c.b16 %v78, %v78
  %87 = vst [vmem:[#allocation2] sm:$0xff] %v79
  %88 = vst [vmem:[#allocation2 + $0x8] sm:$0xf] %v80
  %89 = vst [vmem:[#allocation2 + $0xc] sm:$0xff] %v81
  %90 = vst [vmem:[#allocation2 + $0x14] sm:$0xf] %v82
  %91 = vrot.lane.b32.xlu0 %v40, 1
  %v92 = vpop.permute.xlu0 %91
  %93 = vrot.lane.b32.xlu0 %v43, 1
  %v94 = vpop.permute.xlu0 %93
  %95 = vrot.lane.b32.xlu0 %v41, 1
  %v96 = vpop.permute.xlu0 %95
  %97 = vrot.lane.b32.xlu0 %v44, 1
  %v98 = vpop.permute.xlu0 %97
  %99 = vrot.lane.b32.xlu0 %v42, 1
  %v100 = vpop.permute.xlu0 %99
  %101 = vrot.lane.b32.xlu0 %v45, 1
  %v102 = vpop.permute.xlu0 %101
  %vm103 = vcmp.lt.s32.totalorder %v59, 1
  %v104 = vsel %vm103, %v96, %v100
  %v105 = vsel %vm103, %v98, %v102
  %v106 = vsel %vm103, %v92, %v96
  %v107 = vsel %vm103, %v94, %v98
  %v108 = vsel %vm103, %v100, %v92
  %v109 = vsel %vm103, %v102, %v94
  %v110 = vpack.c.bf16 %v109, %v108
  %v111 = vpack.c.bf16 %v107, %v106
  %v112 = vpack.c.bf16 %v105, %v104
  %v116 = vunpack.c.l.b16 %v110
  %v117 = vunpack.c.l.b16 %v111
  %v118 = vunpack.c.l.b16 %v112
  %v119 = vunpack.c.h.b16 %v110
  %v120 = vunpack.c.h.b16 %v111
  %v121 = vunpack.c.h.b16 %v112
  %v122 = vpack.c.b16 %v117, %v116
  %v123 = vpack.c.b16 %v118, %v118
  %v124 = vpack.c.b16 %v120, %v119
  %v125 = vpack.c.b16 %v121, %v121
  %130 = vst [vmem:[#allocation2 + $0x18] sm:$0xff] %v122
  %131 = vst [vmem:[#allocation2 + $0x20] sm:$0xf] %v123
  %132 = vst [vmem:[#allocation2 + $0x24] sm:$0xff] %v124
  %133 = vst [vmem:[#allocation2 + $0x2c] sm:$0xf] %v125
  %v134 = vpack.c.bf16 %v43, %v40
  %v135 = vpack.c.bf16 %v44, %v41
  %v136 = vpack.c.bf16 %v45, %v42
  %v140 = vunpack.c.l.b16 %v134
  %v141 = vunpack.c.l.b16 %v135
  %v142 = vunpack.c.l.b16 %v136
  %v143 = vunpack.c.h.b16 %v134
  %v144 = vunpack.c.h.b16 %v135
  %v145 = vunpack.c.h.b16 %v136
  %v146 = vpack.c.b16 %v141, %v140
  %v147 = vpack.c.b16 %v142, %v142
  %v148 = vpack.c.b16 %v144, %v143
  %v149 = vpack.c.b16 %v145, %v145
  %154 = vst [vmem:[#allocation2 + $0x30] sm:$0xff] %v146
  %155 = vst [vmem:[#allocation2 + $0x38] sm:$0xf] %v147
  %156 = vst [vmem:[#allocation2 + $0x3c] sm:$0xff] %v148
  %157 = vst [vmem:[#allocation2 + $0x44] sm:$0xf] %v149
  %158 = vrot.lane.b32.xlu0 %v40, 127
  %v159 = vpop.permute.xlu0 %158
  %160 = vrot.lane.b32.xlu0 %v43, 127
  %v161 = vpop.permute.xlu0 %160
  %162 = vrot.lane.b32.xlu0 %v41, 127
  %v163 = vpop.permute.xlu0 %162
  %164 = vrot.lane.b32.xlu0 %v44, 127
  %v165 = vpop.permute.xlu0 %164
  %166 = vrot.lane.b32.xlu0 %v42, 127
  %v167 = vpop.permute.xlu0 %166
  %168 = vrot.lane.b32.xlu0 %v45, 127
  %v169 = vpop.permute.xlu0 %168
  %vm170 = vcmp.lt.s32.totalorder %v59, 127
  %v171 = vsel %vm170, %v163, %v167
  %v172 = vsel %vm170, %v165, %v169
  %v173 = vsel %vm170, %v159, %v163
  %v174 = vsel %vm170, %v161, %v165
  %v175 = vsel %vm170, %v167, %v159
  %v176 = vsel %vm170, %v169, %v161
  %v177 = vpack.c.bf16 %v174, %v173
  %v178 = vpack.c.bf16 %v172, %v171
  %v179 = vpack.c.bf16 %v176, %v175
  %v183 = vunpack.c.l.b16 %v177
  %v184 = vunpack.c.l.b16 %v178
  %v185 = vunpack.c.l.b16 %v179
  %v186 = vunpack.c.h.b16 %v177
  %v187 = vunpack.c.h.b16 %v178
  %v188 = vunpack.c.h.b16 %v179
  %v189 = vpack.c.b16 %v184, %v183
  %v190 = vpack.c.b16 %v185, %v185
  %v191 = vpack.c.b16 %v187, %v186
  %v192 = vpack.c.b16 %v188, %v188
  %197 = vst [vmem:[#allocation2 + $0x48] sm:$0xff] %v189
  %198 = vst [vmem:[#allocation2 + $0x50] sm:$0xf] %v190
  %199 = vst [vmem:[#allocation2 + $0x54] sm:$0xff] %v191
  %200 = vst [vmem:[#allocation2 + $0x5c] sm:$0xf] %v192
  %201 = vrot.lane.b32.xlu0 %v40, 126
  %v202 = vpop.permute.xlu0 %201
  %203 = vrot.lane.b32.xlu0 %v43, 126
  %v204 = vpop.permute.xlu0 %203
  %205 = vrot.lane.b32.xlu0 %v41, 126
  %v206 = vpop.permute.xlu0 %205
  %207 = vrot.lane.b32.xlu0 %v44, 126
  %v208 = vpop.permute.xlu0 %207
  %209 = vrot.lane.b32.xlu0 %v42, 126
  %v210 = vpop.permute.xlu0 %209
  %211 = vrot.lane.b32.xlu0 %v45, 126
  %v212 = vpop.permute.xlu0 %211
  %vm213 = vcmp.lt.s32.totalorder %v59, 126
  %v214 = vsel %vm213, %v206, %v210
  %v215 = vsel %vm213, %v208, %v212
  %v216 = vsel %vm213, %v202, %v206
  %v217 = vsel %vm213, %v204, %v208
  %v218 = vsel %vm213, %v210, %v202
  %v219 = vsel %vm213, %v212, %v204
  %v220 = vpack.c.bf16 %v217, %v216
  %v221 = vpack.c.bf16 %v215, %v214
  %v222 = vpack.c.bf16 %v219, %v218
  %v226 = vunpack.c.l.b16 %v220
  %v227 = vunpack.c.l.b16 %v221
  %v228 = vunpack.c.l.b16 %v222
  %v229 = vunpack.c.h.b16 %v220
  %v230 = vunpack.c.h.b16 %v221
  %v231 = vunpack.c.h.b16 %v222
  %v232 = vpack.c.b16 %v227, %v226
  %v233 = vpack.c.b16 %v228, %v228
  %v234 = vpack.c.b16 %v230, %v229
  %v235 = vpack.c.b16 %v231, %v231
  %240 = vst [vmem:[#allocation2 + $0x60] sm:$0xff] %v232
  %241 = vst [vmem:[#allocation2 + $0x68] sm:$0xf] %v233
  %242 = vst [vmem:[#allocation2 + $0x6c] sm:$0xff] %v234
  %243 = vst [vmem:[#allocation2 + $0x74] sm:$0xf] %v235
  %v244 = vld [vmem:[#allocation2] sm:$0xff]
  %v245 = vld [vmem:[#allocation2 + $0x8] sm:$0xf]
  %v246 = vld [vmem:[#allocation2 + $0xc] sm:$0xff]
  %v247 = vld [vmem:[#allocation2 + $0x14] sm:$0xf]
  %v248 = vld [vmem:[#allocation2 + $0x18] sm:$0xff]
  %v249 = vld [vmem:[#allocation2 + $0x20] sm:$0xf]
  %v250 = vld [vmem:[#allocation2 + $0x24] sm:$0xff]
  %v251 = vld [vmem:[#allocation2 + $0x2c] sm:$0xf]
  %v252 = vld [vmem:[#allocation2 + $0x30] sm:$0xff]
  %v253 = vld [vmem:[#allocation2 + $0x38] sm:$0xf]
  %v254 = vld [vmem:[#allocation2 + $0x3c] sm:$0xff]
  %v255 = vld [vmem:[#allocation2 + $0x44] sm:$0xf]
  %v256 = vld [vmem:[#allocation2 + $0x48] sm:$0xff]
  %v257 = vld [vmem:[#allocation2 + $0x50] sm:$0xf]
  %v258 = vld [vmem:[#allocation2 + $0x54] sm:$0xff]
  %v259 = vld [vmem:[#allocation2 + $0x5c] sm:$0xf]
  %v260 = vld [vmem:[#allocation2 + $0x60] sm:$0xff]
  %v261 = vld [vmem:[#allocation2 + $0x68] sm:$0xf]
  %v262 = vld [vmem:[#allocation2 + $0x6c] sm:$0xff]
  %v263 = vld [vmem:[#allocation2 + $0x74] sm:$0xf]
  %v266 = vunpack.c.l.b16 %v32
  %v267 = vunpack.c.l.b16 %v33
  %v268 = vpack.c.b16 %v267, %v266
  %v289 = vunpack.c.l.b16 %v244
  %v290 = vunpack.c.h.b16 %v244
  %v291 = vunpack.c.l.b16 %v245
  %v292 = vunpack.c.l.b16 %v246
  %v293 = vunpack.c.h.b16 %v246
  %v294 = vunpack.c.l.b16 %v247
  %v295 = vunpack.c.l.b16 %v248
  %v296 = vunpack.c.h.b16 %v248
  %v297 = vunpack.c.l.b16 %v249
  %v298 = vunpack.c.l.b16 %v250
  %v299 = vunpack.c.h.b16 %v250
  %v300 = vunpack.c.l.b16 %v251
  %v301 = vunpack.c.l.b16 %v252
  %v302 = vunpack.c.h.b16 %v252
  %v303 = vunpack.c.l.b16 %v253
  %v304 = vunpack.c.l.b16 %v254
  %v305 = vunpack.c.h.b16 %v254
  %v306 = vunpack.c.l.b16 %v255
  %v307 = vunpack.c.l.b16 %v256
  %v308 = vunpack.c.h.b16 %v256
  %v309 = vunpack.c.l.b16 %v257
  %v310 = vunpack.c.l.b16 %v258
  %v311 = vunpack.c.h.b16 %v258
  %v312 = vunpack.c.l.b16 %v259
  %v313 = vunpack.c.l.b16 %v260
  %v314 = vunpack.c.h.b16 %v260
  %v315 = vunpack.c.l.b16 %v261
  %v316 = vunpack.c.l.b16 %v262
  %v317 = vunpack.c.h.b16 %v262
  %v318 = vunpack.c.l.b16 %v263
  %v319 = vpack.c.b16 %v292, %v289
  %v320 = vpack.c.b16 %v293, %v290
  %v321 = vpack.c.b16 %v294, %v291
  %v322 = vpack.c.b16 %v298, %v295
  %v323 = vpack.c.b16 %v299, %v296
  %v324 = vpack.c.b16 %v300, %v297
  %v325 = vpack.c.b16 %v304, %v301
  %v326 = vpack.c.b16 %v305, %v302
  %v327 = vpack.c.b16 %v306, %v303
  %v328 = vpack.c.b16 %v310, %v307
  %v329 = vpack.c.b16 %v311, %v308
  %v330 = vpack.c.b16 %v312, %v309
  %v331 = vpack.c.b16 %v316, %v313
  %v332 = vpack.c.b16 %v317, %v314
  %v333 = vpack.c.b16 %v318, %v315
  %vm349 = vcmask 654336
  %v351 = vsel %vm349, %v268, 0
  %353 = vmatprep.subr.bf16.mxu0 0
  %354 = vmatpush1.bf16.msra.mxu0 0
  %355 = vmatprep.subr.bf16.mxu0 0
  %356 = vmatpush1.bf16.msra.mxu0 0
  %357 = vmatprep.subr.bf16.mxu0 0
  %358 = vmatpush1.bf16.msra.mxu0 0
  %359 = vmatprep.subr.bf16.mxu0 %v332
  %360 = vmatpush1.bf16.msra.mxu0 %v331
  %361 = vmatprep.subr.bf16.mxu0 %v329
  %362 = vmatpush1.bf16.msra.mxu0 %v328
  %363 = vmatprep.subr.bf16.mxu0 %v326
  %364 = vmatpush1.bf16.msra.mxu0 %v325
  %365 = vmatprep.subr.bf16.mxu0 %v323
  %366 = vmatpush1.bf16.msra.mxu0 %v322
  %367 = vmatprep.subr.bf16.mxu0 %v320
  %368 = vmatpush1.bf16.msra.mxu0 %v319
  %369 = vmatprep.subr.bf16.mxu0 0
  %370 = vmatpush2.bf16.msra.mxu0 0
  %371 = vmatprep.subr.bf16.mxu0 0
  %372 = vmatpush2.bf16.msra.mxu0 0
  %373 = vmatprep.subr.bf16.mxu0 0
  %374 = vmatpush2.bf16.msra.mxu0 0
  %375 = vmatprep.subr.bf16.mxu0 0
  %376 = vmatpush2.bf16.msra.mxu0 0
  %377 = vmatprep.subr.bf16.mxu0 0
  %378 = vmatpush2.bf16.msra.mxu0 0
  %379 = vmatprep.subr.bf16.mxu0 0
  %380 = vmatpush2.bf16.msra.mxu0 0
  %381 = vmatprep.subr.bf16.mxu0 0
  %382 = vmatpush2.bf16.msra.mxu0 0
  %383 = vmatprep.subr.bf16.mxu0 0
  %384 = vmatpush2.bf16.msra.mxu0 0
  %385 = vmatprep.mubr.bf16.mxu0 0
  %386 = vmatmul.mubr.bf16.gmra.mxu0 %v351
  %v387 = vpop.f32.mrf.mxu0
  %v388 = vadd.f32 0.0, %v387
  %v389 = vpop.f32.mrf.mxu0
  %v390 = vadd.f32 0.0, %v389
  %v391 = vpop.f32.mrf.mxu0
  %v392 = vadd.f32 0.0, %v391
  %v393 = vpop.f32.mrf.mxu0
  %v394 = vadd.f32 0.0, %v393
  %395 = vdwg.mxu0
  %396 = vmatprep.subr.bf16.mxu0 0
  %397 = vmatpush1.bf16.msra.mxu0 0
  %398 = vmatprep.subr.bf16.mxu0 0
  %399 = vmatpush1.bf16.msra.mxu0 0
  %400 = vmatprep.subr.bf16.mxu0 0
  %401 = vmatpush1.bf16.msra.mxu0 0
  %402 = vmatprep.subr.bf16.mxu0 0
  %403 = vmatpush1.bf16.msra.mxu0 %v333
  %404 = vmatprep.subr.bf16.mxu0 0
  %405 = vmatpush1.bf16.msra.mxu0 %v330
  %406 = vmatprep.subr.bf16.mxu0 0
  %407 = vmatpush1.bf16.msra.mxu0 %v327
  %408 = vmatprep.subr.bf16.mxu0 0
  %409 = vmatpush1.bf16.msra.mxu0 %v324
  %410 = vmatprep.subr.bf16.mxu0 0
  %411 = vmatpush1.bf16.msra.mxu0 %v321
  %412 = vmatprep.subr.bf16.mxu0 0
  %413 = vmatpush2.bf16.msra.mxu0 0
  %414 = vmatprep.subr.bf16.mxu0 0
  %415 = vmatpush2.bf16.msra.mxu0 0
  %416 = vmatprep.subr.bf16.mxu0 0
  %417 = vmatpush2.bf16.msra.mxu0 0
  %418 = vmatprep.subr.bf16.mxu0 0
  %419 = vmatpush2.bf16.msra.mxu0 0
  %420 = vmatprep.subr.bf16.mxu0 0
  %421 = vmatpush2.bf16.msra.mxu0 0
  %422 = vmatprep.subr.bf16.mxu0 0
  %423 = vmatpush2.bf16.msra.mxu0 0
  %424 = vmatprep.subr.bf16.mxu0 0
  %425 = vmatpush2.bf16.msra.mxu0 0
  %426 = vmatprep.subr.bf16.mxu0 0
  %427 = vmatpush2.bf16.msra.mxu0 0
  %428 = vmatprep.mubr.bf16.mxu0 0
  %429 = vmatmul.mubr.bf16.gmra.mxu0 %v351
  %v430 = vpop.f32.mrf.mxu0
  %v431 = vadd.f32 0.0, %v430
  %v432 = vpop.f32.mrf.mxu0
  %v433 = vpop.f32.mrf.mxu0
  %v434 = vadd.f32 0.0, %v433
  %v435 = vpop.f32.mrf.mxu0
  %436 = vdwg.mxu0
  %vm437 = vcmp.gt.f32.partialorder %v388, 0.0
  %vm438 = vcmp.gt.f32.partialorder %v390, 0.0
  %vm439 = vcmp.gt.f32.partialorder %v431, 0.0
  %vm440 = vcmp.gt.f32.partialorder %v392, 0.0
  %vm441 = vcmp.gt.f32.partialorder %v394, 0.0
  %vm442 = vcmp.gt.f32.partialorder %v434, 0.0
  %v443 = vmul.f32 %v388, 0.01
  %v444 = vmul.f32 %v390, 0.01
  %v445 = vmul.f32 %v431, 0.01
  %v446 = vmul.f32 %v392, 0.01
  %v447 = vmul.f32 %v394, 0.01
  %v448 = vmul.f32 %v434, 0.01
  %v449 = vsel %vm437, %v388, %v443
  %v450 = vsel %vm438, %v390, %v444
  %v451 = vsel %vm439, %v431, %v445
  %v452 = vsel %vm440, %v392, %v446
  %v453 = vsel %vm441, %v394, %v447
  %v454 = vsel %vm442, %v434, %v448
  %v455 = vmul.f32 %v449, %v20
  %v456 = vmul.f32 %v450, %v24
  %v457 = vmul.f32 %v451, %v28
  %v458 = vmul.f32 %v452, %v20
  %v459 = vmul.f32 %v453, %v24
  %v460 = vmul.f32 %v454, %v28
  %461 = vrot.lane.b32.xlu0 %v455, 2
  %v462 = vpop.permute.xlu0 %461
  %463 = vrot.lane.b32.xlu0 %v458, 2
  %v464 = vpop.permute.xlu0 %463
  %465 = vrot.lane.b32.xlu0 %v456, 2
  %v466 = vpop.permute.xlu0 %465
  %467 = vrot.lane.b32.xlu0 %v459, 2
  %v468 = vpop.permute.xlu0 %467
  %469 = vrot.lane.b32.xlu0 %v457, 2
  %v470 = vpop.permute.xlu0 %469
  %471 = vrot.lane.b32.xlu0 %v460, 2
  %v472 = vpop.permute.xlu0 %471
  %v473 = vsel %vm60, %v466, %v470
  %v474 = vsel %vm60, %v468, %v472
  %v475 = vsel %vm60, %v462, %v466
  %v476 = vsel %vm60, %v464, %v468
  %v477 = vsel %vm60, %v470, %v462
  %v478 = vsel %vm60, %v472, %v464
  %v479 = vpack.c.bf16 %v478, %v477
  %v480 = vpack.c.bf16 %v476, %v475
  %v481 = vpack.c.bf16 %v474, %v473
  %v485 = vunpack.c.l.b16 %v479
  %v486 = vunpack.c.l.b16 %v480
  %v487 = vunpack.c.l.b16 %v481
  %v488 = vunpack.c.h.b16 %v479
  %v489 = vunpack.c.h.b16 %v480
  %v490 = vunpack.c.h.b16 %v481
  %v491 = vpack.c.b16 %v486, %v485
  %v492 = vpack.c.b16 %v487, %v487
  %v493 = vpack.c.b16 %v489, %v488
  %v494 = vpack.c.b16 %v490, %v490
  %499 = vst [vmem:[#allocation2] sm:$0xff] %v491
  %500 = vst [vmem:[#allocation2 + $0x8] sm:$0xf] %v492
  %501 = vst [vmem:[#allocation2 + $0xc] sm:$0xff] %v493
  %502 = vst [vmem:[#allocation2 + $0x14] sm:$0xf] %v494
  %503 = vrot.lane.b32.xlu0 %v455, 1
  %v504 = vpop.permute.xlu0 %503
  %505 = vrot.lane.b32.xlu0 %v458, 1
  %v506 = vpop.permute.xlu0 %505
  %507 = vrot.lane.b32.xlu0 %v456, 1
  %v508 = vpop.permute.xlu0 %507
  %509 = vrot.lane.b32.xlu0 %v459, 1
  %v510 = vpop.permute.xlu0 %509
  %511 = vrot.lane.b32.xlu0 %v457, 1
  %v512 = vpop.permute.xlu0 %511
  %513 = vrot.lane.b32.xlu0 %v460, 1
  %v514 = vpop.permute.xlu0 %513
  %v515 = vsel %vm103, %v508, %v512
  %v516 = vsel %vm103, %v510, %v514
  %v517 = vsel %vm103, %v504, %v508
  %v518 = vsel %vm103, %v506, %v510
  %v519 = vsel %vm103, %v512, %v504
  %v520 = vsel %vm103, %v514, %v506
  %v521 = vpack.c.bf16 %v520, %v519
  %v522 = vpack.c.bf16 %v518, %v517
  %v523 = vpack.c.bf16 %v516, %v515
  %v527 = vunpack.c.l.b16 %v521
  %v528 = vunpack.c.l.b16 %v522
  %v529 = vunpack.c.l.b16 %v523
  %v530 = vunpack.c.h.b16 %v521
  %v531 = vunpack.c.h.b16 %v522
  %v532 = vunpack.c.h.b16 %v523
  %v533 = vpack.c.b16 %v528, %v527
  %v534 = vpack.c.b16 %v529, %v529
  %v535 = vpack.c.b16 %v531, %v530
  %v536 = vpack.c.b16 %v532, %v532
  %541 = vst [vmem:[#allocation2 + $0x18] sm:$0xff] %v533
  %542 = vst [vmem:[#allocation2 + $0x20] sm:$0xf] %v534
  %543 = vst [vmem:[#allocation2 + $0x24] sm:$0xff] %v535
  %544 = vst [vmem:[#allocation2 + $0x2c] sm:$0xf] %v536
  %v545 = vpack.c.bf16 %v458, %v455
  %v546 = vpack.c.bf16 %v459, %v456
  %v547 = vpack.c.bf16 %v460, %v457
  %v551 = vunpack.c.l.b16 %v545
  %v552 = vunpack.c.l.b16 %v546
  %v553 = vunpack.c.l.b16 %v547
  %v554 = vunpack.c.h.b16 %v545
  %v555 = vunpack.c.h.b16 %v546
  %v556 = vunpack.c.h.b16 %v547
  %v557 = vpack.c.b16 %v552, %v551
  %v558 = vpack.c.b16 %v553, %v553
  %v559 = vpack.c.b16 %v555, %v554
  %v560 = vpack.c.b16 %v556, %v556
  %565 = vst [vmem:[#allocation2 + $0x30] sm:$0xff] %v557
  %566 = vst [vmem:[#allocation2 + $0x38] sm:$0xf] %v558
  %567 = vst [vmem:[#allocation2 + $0x3c] sm:$0xff] %v559
  %568 = vst [vmem:[#allocation2 + $0x44] sm:$0xf] %v560
  %569 = vrot.lane.b32.xlu0 %v455, 127
  %v570 = vpop.permute.xlu0 %569
  %571 = vrot.lane.b32.xlu0 %v458, 127
  %v572 = vpop.permute.xlu0 %571
  %573 = vrot.lane.b32.xlu0 %v456, 127
  %v574 = vpop.permute.xlu0 %573
  %575 = vrot.lane.b32.xlu0 %v459, 127
  %v576 = vpop.permute.xlu0 %575
  %577 = vrot.lane.b32.xlu0 %v457, 127
  %v578 = vpop.permute.xlu0 %577
  %579 = vrot.lane.b32.xlu0 %v460, 127
  %v580 = vpop.permute.xlu0 %579
  %v581 = vsel %vm170, %v574, %v578
  %v582 = vsel %vm170, %v576, %v580
  %v583 = vsel %vm170, %v570, %v574
  %v584 = vsel %vm170, %v572, %v576
  %v585 = vsel %vm170, %v578, %v570
  %v586 = vsel %vm170, %v580, %v572
  %v587 = vpack.c.bf16 %v584, %v583
  %v588 = vpack.c.bf16 %v582, %v581
  %v589 = vpack.c.bf16 %v586, %v585
  %v593 = vunpack.c.l.b16 %v587
  %v594 = vunpack.c.l.b16 %v588
  %v595 = vunpack.c.l.b16 %v589
  %v596 = vunpack.c.h.b16 %v587
  %v597 = vunpack.c.h.b16 %v588
  %v598 = vunpack.c.h.b16 %v589
  %v599 = vpack.c.b16 %v594, %v593
  %v600 = vpack.c.b16 %v595, %v595
  %v601 = vpack.c.b16 %v597, %v596
  %v602 = vpack.c.b16 %v598, %v598
  %607 = vst [vmem:[#allocation2 + $0x48] sm:$0xff] %v599
  %608 = vst [vmem:[#allocation2 + $0x50] sm:$0xf] %v600
  %609 = vst [vmem:[#allocation2 + $0x54] sm:$0xff] %v601
  %610 = vst [vmem:[#allocation2 + $0x5c] sm:$0xf] %v602
  %611 = vrot.lane.b32.xlu0 %v455, 126
  %v612 = vpop.permute.xlu0 %611
  %613 = vrot.lane.b32.xlu0 %v458, 126
  %v614 = vpop.permute.xlu0 %613
  %615 = vrot.lane.b32.xlu0 %v456, 126
  %v616 = vpop.permute.xlu0 %615
  %617 = vrot.lane.b32.xlu0 %v459, 126
  %v618 = vpop.permute.xlu0 %617
  %619 = vrot.lane.b32.xlu0 %v457, 126
  %v620 = vpop.permute.xlu0 %619
  %621 = vrot.lane.b32.xlu0 %v460, 126
  %v622 = vpop.permute.xlu0 %621
  %v623 = vsel %vm213, %v616, %v620
  %v624 = vsel %vm213, %v618, %v622
  %v625 = vsel %vm213, %v612, %v616
  %v626 = vsel %vm213, %v614, %v618
  %v627 = vsel %vm213, %v620, %v612
  %v628 = vsel %vm213, %v622, %v614
  %v629 = vpack.c.bf16 %v626, %v625
  %v630 = vpack.c.bf16 %v624, %v623
  %v631 = vpack.c.bf16 %v628, %v627
  %v635 = vunpack.c.l.b16 %v629
  %v636 = vunpack.c.l.b16 %v630
  %v637 = vunpack.c.l.b16 %v631
  %v638 = vunpack.c.h.b16 %v629
  %v639 = vunpack.c.h.b16 %v630
  %v640 = vunpack.c.h.b16 %v631
  %v641 = vpack.c.b16 %v636, %v635
  %v642 = vpack.c.b16 %v637, %v637
  %v643 = vpack.c.b16 %v639, %v638
  %v644 = vpack.c.b16 %v640, %v640
  %649 = vst [vmem:[#allocation2 + $0x60] sm:$0xff] %v641
  %650 = vst [vmem:[#allocation2 + $0x68] sm:$0xf] %v642
  %651 = vst [vmem:[#allocation2 + $0x6c] sm:$0xff] %v643
  %652 = vst [vmem:[#allocation2 + $0x74] sm:$0xf] %v644
  %v653 = vld [vmem:[#allocation2] sm:$0xff]
  %v654 = vld [vmem:[#allocation2 + $0x8] sm:$0xf]
  %v655 = vld [vmem:[#allocation2 + $0xc] sm:$0xff]
  %v656 = vld [vmem:[#allocation2 + $0x14] sm:$0xf]
  %v657 = vld [vmem:[#allocation2 + $0x18] sm:$0xff]
  %v658 = vld [vmem:[#allocation2 + $0x20] sm:$0xf]
  %v659 = vld [vmem:[#allocation2 + $0x24] sm:$0xff]
  %v660 = vld [vmem:[#allocation2 + $0x2c] sm:$0xf]
  %v661 = vld [vmem:[#allocation2 + $0x30] sm:$0xff]
  %v662 = vld [vmem:[#allocation2 + $0x38] sm:$0xf]
  %v663 = vld [vmem:[#allocation2 + $0x3c] sm:$0xff]
  %v664 = vld [vmem:[#allocation2 + $0x44] sm:$0xf]
  %v665 = vld [vmem:[#allocation2 + $0x48] sm:$0xff]
  %v666 = vld [vmem:[#allocation2 + $0x50] sm:$0xf]
  %v667 = vld [vmem:[#allocation2 + $0x54] sm:$0xff]
  %v668 = vld [vmem:[#allocation2 + $0x5c] sm:$0xf]
  %v669 = vld [vmem:[#allocation2 + $0x60] sm:$0xff]
  %v670 = vld [vmem:[#allocation2 + $0x68] sm:$0xf]
  %v671 = vld [vmem:[#allocation2 + $0x6c] sm:$0xff]
  %v672 = vld [vmem:[#allocation2 + $0x74] sm:$0xf]
  %v675 = vunpack.c.l.b16 %v34
  %v676 = vunpack.c.l.b16 %v35
  %v677 = vpack.c.b16 %v676, %v675
  %v698 = vunpack.c.l.b16 %v653
  %v699 = vunpack.c.h.b16 %v653
  %v700 = vunpack.c.l.b16 %v654
  %v701 = vunpack.c.l.b16 %v655
  %v702 = vunpack.c.h.b16 %v655
  %v703 = vunpack.c.l.b16 %v656
  %v704 = vunpack.c.l.b16 %v657
  %v705 = vunpack.c.h.b16 %v657
  %v706 = vunpack.c.l.b16 %v658
  %v707 = vunpack.c.l.b16 %v659
  %v708 = vunpack.c.h.b16 %v659
  %v709 = vunpack.c.l.b16 %v660
  %v710 = vunpack.c.l.b16 %v661
  %v711 = vunpack.c.h.b16 %v661
  %v712 = vunpack.c.l.b16 %v662
  %v713 = vunpack.c.l.b16 %v663
  %v714 = vunpack.c.h.b16 %v663
  %v715 = vunpack.c.l.b16 %v664
  %v716 = vunpack.c.l.b16 %v665
  %v717 = vunpack.c.h.b16 %v665
  %v718 = vunpack.c.l.b16 %v666
  %v719 = vunpack.c.l.b16 %v667
  %v720 = vunpack.c.h.b16 %v667
  %v721 = vunpack.c.l.b16 %v668
  %v722 = vunpack.c.l.b16 %v669
  %v723 = vunpack.c.h.b16 %v669
  %v724 = vunpack.c.l.b16 %v670
  %v725 = vunpack.c.l.b16 %v671
  %v726 = vunpack.c.h.b16 %v671
  %v727 = vunpack.c.l.b16 %v672
  %v728 = vpack.c.b16 %v701, %v698
  %v729 = vpack.c.b16 %v702, %v699
  %v730 = vpack.c.b16 %v703, %v700
  %v731 = vpack.c.b16 %v707, %v704
  %v732 = vpack.c.b16 %v708, %v705
  %v733 = vpack.c.b16 %v709, %v706
  %v734 = vpack.c.b16 %v713, %v710
  %v735 = vpack.c.b16 %v714, %v711
  %v736 = vpack.c.b16 %v715, %v712
  %v737 = vpack.c.b16 %v719, %v716
  %v738 = vpack.c.b16 %v720, %v717
  %v739 = vpack.c.b16 %v721, %v718
  %v740 = vpack.c.b16 %v725, %v722
  %v741 = vpack.c.b16 %v726, %v723
  %v742 = vpack.c.b16 %v727, %v724
  %v759 = vsel %vm349, %v677, 0
  %761 = vmatprep.subr.bf16.mxu0 0
  %762 = vmatpush1.bf16.msra.mxu0 0
  %763 = vmatprep.subr.bf16.mxu0 0
  %764 = vmatpush1.bf16.msra.mxu0 0
  %765 = vmatprep.subr.bf16.mxu0 0
  %766 = vmatpush1.bf16.msra.mxu0 0
  %767 = vmatprep.subr.bf16.mxu0 %v741
  %768 = vmatpush1.bf16.msra.mxu0 %v740
  %769 = vmatprep.subr.bf16.mxu0 %v738
  %770 = vmatpush1.bf16.msra.mxu0 %v737
  %771 = vmatprep.subr.bf16.mxu0 %v735
  %772 = vmatpush1.bf16.msra.mxu0 %v734
  %773 = vmatprep.subr.bf16.mxu0 %v732
  %774 = vmatpush1.bf16.msra.mxu0 %v731
  %775 = vmatprep.subr.bf16.mxu0 %v729
  %776 = vmatpush1.bf16.msra.mxu0 %v728
  %777 = vmatprep.subr.bf16.mxu0 0
  %778 = vmatpush2.bf16.msra.mxu0 0
  %779 = vmatprep.subr.bf16.mxu0 0
  %780 = vmatpush2.bf16.msra.mxu0 0
  %781 = vmatprep.subr.bf16.mxu0 0
  %782 = vmatpush2.bf16.msra.mxu0 0
  %783 = vmatprep.subr.bf16.mxu0 0
  %784 = vmatpush2.bf16.msra.mxu0 0
  %785 = vmatprep.subr.bf16.mxu0 0
  %786 = vmatpush2.bf16.msra.mxu0 0
  %787 = vmatprep.subr.bf16.mxu0 0
  %788 = vmatpush2.bf16.msra.mxu0 0
  %789 = vmatprep.subr.bf16.mxu0 0
  %790 = vmatpush2.bf16.msra.mxu0 0
  %791 = vmatprep.subr.bf16.mxu0 0
  %792 = vmatpush2.bf16.msra.mxu0 0
  %793 = vmatprep.mubr.bf16.mxu0 0
  %794 = vmatmul.mubr.bf16.gmra.mxu0 %v759
  %v795 = vpop.f32.mrf.mxu0
  %v796 = vadd.f32 0.0, %v795
  %v797 = vpop.f32.mrf.mxu0
  %v798 = vadd.f32 0.0, %v797
  %v799 = vpop.f32.mrf.mxu0
  %v800 = vadd.f32 0.0, %v799
  %v801 = vpop.f32.mrf.mxu0
  %v802 = vadd.f32 0.0, %v801
  %803 = vdwg.mxu0
  %804 = vmatprep.subr.bf16.mxu0 0
  %805 = vmatpush1.bf16.msra.mxu0 0
  %806 = vmatprep.subr.bf16.mxu0 0
  %807 = vmatpush1.bf16.msra.mxu0 0
  %808 = vmatprep.subr.bf16.mxu0 0
  %809 = vmatpush1.bf16.msra.mxu0 0
  %810 = vmatprep.subr.bf16.mxu0 0
  %811 = vmatpush1.bf16.msra.mxu0 %v742
  %812 = vmatprep.subr.bf16.mxu0 0
  %813 = vmatpush1.bf16.msra.mxu0 %v739
  %814 = vmatprep.subr.bf16.mxu0 0
  %815 = vmatpush1.bf16.msra.mxu0 %v736
  %816 = vmatprep.subr.bf16.mxu0 0
  %817 = vmatpush1.bf16.msra.mxu0 %v733
  %818 = vmatprep.subr.bf16.mxu0 0
  %819 = vmatpush1.bf16.msra.mxu0 %v730
  %820 = vmatprep.subr.bf16.mxu0 0
  %821 = vmatpush2.bf16.msra.mxu0 0
  %822 = vmatprep.subr.bf16.mxu0 0
  %823 = vmatpush2.bf16.msra.mxu0 0
  %824 = vmatprep.subr.bf16.mxu0 0
  %825 = vmatpush2.bf16.msra.mxu0 0
  %826 = vmatprep.subr.bf16.mxu0 0
  %827 = vmatpush2.bf16.msra.mxu0 0
  %828 = vmatprep.subr.bf16.mxu0 0
  %829 = vmatpush2.bf16.msra.mxu0 0
  %830 = vmatprep.subr.bf16.mxu0 0
  %831 = vmatpush2.bf16.msra.mxu0 0
  %832 = vmatprep.subr.bf16.mxu0 0
  %833 = vmatpush2.bf16.msra.mxu0 0
  %834 = vmatprep.subr.bf16.mxu0 0
  %835 = vmatpush2.bf16.msra.mxu0 0
  %836 = vmatprep.mubr.bf16.mxu0 0
  %837 = vmatmul.mubr.bf16.gmra.mxu0 %v759
  %v838 = vpop.f32.mrf.mxu0
  %v839 = vadd.f32 0.0, %v838
  %v840 = vpop.f32.mrf.mxu0
  %v841 = vpop.f32.mrf.mxu0
  %v842 = vadd.f32 0.0, %v841
  %v843 = vpop.f32.mrf.mxu0
  %844 = vdwg.mxu0
  %vm845 = vcmp.gt.f32.partialorder %v796, 0.0
  %vm846 = vcmp.gt.f32.partialorder %v798, 0.0
  %vm847 = vcmp.gt.f32.partialorder %v839, 0.0
  %vm848 = vcmp.gt.f32.partialorder %v800, 0.0
  %vm849 = vcmp.gt.f32.partialorder %v802, 0.0
  %vm850 = vcmp.gt.f32.partialorder %v842, 0.0
  %v851 = vmul.f32 %v796, 0.01
  %v852 = vmul.f32 %v798, 0.01
  %v853 = vmul.f32 %v839, 0.01
  %v854 = vmul.f32 %v800, 0.01
  %v855 = vmul.f32 %v802, 0.01
  %v856 = vmul.f32 %v842, 0.01
  %v857 = vsel %vm845, %v796, %v851
  %v858 = vsel %vm846, %v798, %v852
  %v859 = vsel %vm847, %v839, %v853
  %v860 = vsel %vm848, %v800, %v854
  %v861 = vsel %vm849, %v802, %v855
  %v862 = vsel %vm850, %v842, %v856
  %v863 = vmul.f32 %v857, %v20
  %v864 = vmul.f32 %v858, %v24
  %v865 = vmul.f32 %v859, %v28
  %v866 = vmul.f32 %v860, %v20
  %v867 = vmul.f32 %v861, %v24
  %v868 = vmul.f32 %v862, %v28
  %869 = vrot.lane.b32.xlu0 %v863, 2
  %v870 = vpop.permute.xlu0 %869
  %871 = vrot.lane.b32.xlu0 %v866, 2
  %v872 = vpop.permute.xlu0 %871
  %873 = vrot.lane.b32.xlu0 %v864, 2
  %v874 = vpop.permute.xlu0 %873
  %875 = vrot.lane.b32.xlu0 %v867, 2
  %v876 = vpop.permute.xlu0 %875
  %877 = vrot.lane.b32.xlu0 %v865, 2
  %v878 = vpop.permute.xlu0 %877
  %879 = vrot.lane.b32.xlu0 %v868, 2
  %v880 = vpop.permute.xlu0 %879
  %v881 = vsel %vm60, %v874, %v878
  %v882 = vsel %vm60, %v876, %v880
  %v883 = vsel %vm60, %v870, %v874
  %v884 = vsel %vm60, %v872, %v876
  %v885 = vsel %vm60, %v878, %v870
  %v886 = vsel %vm60, %v880, %v872
  %v887 = vpack.c.bf16 %v886, %v885
  %v888 = vpack.c.bf16 %v884, %v883
  %v889 = vpack.c.bf16 %v882, %v881
  %v893 = vunpack.c.l.b16 %v887
  %v894 = vunpack.c.l.b16 %v888
  %v895 = vunpack.c.l.b16 %v889
  %v896 = vunpack.c.h.b16 %v887
  %v897 = vunpack.c.h.b16 %v888
  %v898 = vunpack.c.h.b16 %v889
  %v899 = vpack.c.b16 %v894, %v893
  %v900 = vpack.c.b16 %v895, %v895
  %v901 = vpack.c.b16 %v897, %v896
  %v902 = vpack.c.b16 %v898, %v898
  %907 = vst [vmem:[#allocation2] sm:$0xff] %v899
  %908 = vst [vmem:[#allocation2 + $0x8] sm:$0xf] %v900
  %909 = vst [vmem:[#allocation2 + $0xc] sm:$0xff] %v901
  %910 = vst [vmem:[#allocation2 + $0x14] sm:$0xf] %v902
  %911 = vrot.lane.b32.xlu0 %v863, 1
  %v912 = vpop.permute.xlu0 %911
  %913 = vrot.lane.b32.xlu0 %v866, 1
  %v914 = vpop.permute.xlu0 %913
  %915 = vrot.lane.b32.xlu0 %v864, 1
  %v916 = vpop.permute.xlu0 %915
  %917 = vrot.lane.b32.xlu0 %v867, 1
  %v918 = vpop.permute.xlu0 %917
  %919 = vrot.lane.b32.xlu0 %v865, 1
  %v920 = vpop.permute.xlu0 %919
  %921 = vrot.lane.b32.xlu0 %v868, 1
  %v922 = vpop.permute.xlu0 %921
  %v923 = vsel %vm103, %v916, %v920
  %v924 = vsel %vm103, %v918, %v922
  %v925 = vsel %vm103, %v912, %v916
  %v926 = vsel %vm103, %v914, %v918
  %v927 = vsel %vm103, %v920, %v912
  %v928 = vsel %vm103, %v922, %v914
  %v929 = vpack.c.bf16 %v928, %v927
  %v930 = vpack.c.bf16 %v926, %v925
  %v931 = vpack.c.bf16 %v924, %v923
  %v935 = vunpack.c.l.b16 %v929
  %v936 = vunpack.c.l.b16 %v930
  %v937 = vunpack.c.l.b16 %v931
  %v938 = vunpack.c.h.b16 %v929
  %v939 = vunpack.c.h.b16 %v930
  %v940 = vunpack.c.h.b16 %v931
  %v941 = vpack.c.b16 %v936, %v935
  %v942 = vpack.c.b16 %v937, %v937
  %v943 = vpack.c.b16 %v939, %v938
  %v944 = vpack.c.b16 %v940, %v940
  %949 = vst [vmem:[#allocation2 + $0x18] sm:$0xff] %v941
  %950 = vst [vmem:[#allocation2 + $0x20] sm:$0xf] %v942
  %951 = vst [vmem:[#allocation2 + $0x24] sm:$0xff] %v943
  %952 = vst [vmem:[#allocation2 + $0x2c] sm:$0xf] %v944
  %v953 = vpack.c.bf16 %v866, %v863
  %v954 = vpack.c.bf16 %v867, %v864
  %v955 = vpack.c.bf16 %v868, %v865
  %v959 = vunpack.c.l.b16 %v953
  %v960 = vunpack.c.l.b16 %v954
  %v961 = vunpack.c.l.b16 %v955
  %v962 = vunpack.c.h.b16 %v953
  %v963 = vunpack.c.h.b16 %v954
  %v964 = vunpack.c.h.b16 %v955
  %v965 = vpack.c.b16 %v960, %v959
  %v966 = vpack.c.b16 %v961, %v961
  %v967 = vpack.c.b16 %v963, %v962
  %v968 = vpack.c.b16 %v964, %v964
  %973 = vst [vmem:[#allocation2 + $0x30] sm:$0xff] %v965
  %974 = vst [vmem:[#allocation2 + $0x38] sm:$0xf] %v966
  %975 = vst [vmem:[#allocation2 + $0x3c] sm:$0xff] %v967
  %976 = vst [vmem:[#allocation2 + $0x44] sm:$0xf] %v968
  %977 = vrot.lane.b32.xlu0 %v863, 127
  %v978 = vpop.permute.xlu0 %977
  %979 = vrot.lane.b32.xlu0 %v866, 127
  %v980 = vpop.permute.xlu0 %979
  %981 = vrot.lane.b32.xlu0 %v864, 127
  %v982 = vpop.permute.xlu0 %981
  %983 = vrot.lane.b32.xlu0 %v867, 127
  %v984 = vpop.permute.xlu0 %983
  %985 = vrot.lane.b32.xlu0 %v865, 127
  %v986 = vpop.permute.xlu0 %985
  %987 = vrot.lane.b32.xlu0 %v868, 127
  %v988 = vpop.permute.xlu0 %987
  %v989 = vsel %vm170, %v982, %v986
  %v990 = vsel %vm170, %v984, %v988
  %v991 = vsel %vm170, %v978, %v982
  %v992 = vsel %vm170, %v980, %v984
  %v993 = vsel %vm170, %v986, %v978
  %v994 = vsel %vm170, %v988, %v980
  %v995 = vpack.c.bf16 %v992, %v991
  %v996 = vpack.c.bf16 %v990, %v989
  %v997 = vpack.c.bf16 %v994, %v993
  %v1001 = vunpack.c.l.b16 %v995
  %v1002 = vunpack.c.l.b16 %v996
  %v1003 = vunpack.c.l.b16 %v997
  %v1004 = vunpack.c.h.b16 %v995
  %v1005 = vunpack.c.h.b16 %v996
  %v1006 = vunpack.c.h.b16 %v997
  %v1007 = vpack.c.b16 %v1002, %v1001
  %v1008 = vpack.c.b16 %v1003, %v1003
  %v1009 = vpack.c.b16 %v1005, %v1004
  %v1010 = vpack.c.b16 %v1006, %v1006
  %1015 = vst [vmem:[#allocation2 + $0x48] sm:$0xff] %v1007
  %1016 = vst [vmem:[#allocation2 + $0x50] sm:$0xf] %v1008
  %1017 = vst [vmem:[#allocation2 + $0x54] sm:$0xff] %v1009
  %1018 = vst [vmem:[#allocation2 + $0x5c] sm:$0xf] %v1010
  %1019 = vrot.lane.b32.xlu0 %v863, 126
  %v1020 = vpop.permute.xlu0 %1019
  %1021 = vrot.lane.b32.xlu0 %v866, 126
  %v1022 = vpop.permute.xlu0 %1021
  %1023 = vrot.lane.b32.xlu0 %v864, 126
  %v1024 = vpop.permute.xlu0 %1023
  %1025 = vrot.lane.b32.xlu0 %v867, 126
  %v1026 = vpop.permute.xlu0 %1025
  %1027 = vrot.lane.b32.xlu0 %v865, 126
  %v1028 = vpop.permute.xlu0 %1027
  %1029 = vrot.lane.b32.xlu0 %v868, 126
  %v1030 = vpop.permute.xlu0 %1029
  %v1031 = vsel %vm213, %v1024, %v1028
  %v1032 = vsel %vm213, %v1026, %v1030
  %v1033 = vsel %vm213, %v1020, %v1024
  %v1034 = vsel %vm213, %v1022, %v1026
  %v1035 = vsel %vm213, %v1028, %v1020
  %v1036 = vsel %vm213, %v1030, %v1022
  %v1037 = vpack.c.bf16 %v1034, %v1033
  %v1038 = vpack.c.bf16 %v1032, %v1031
  %v1039 = vpack.c.bf16 %v1036, %v1035
  %v1043 = vunpack.c.l.b16 %v1037
  %v1044 = vunpack.c.l.b16 %v1038
  %v1045 = vunpack.c.l.b16 %v1039
  %v1046 = vunpack.c.h.b16 %v1037
  %v1047 = vunpack.c.h.b16 %v1038
  %v1048 = vunpack.c.h.b16 %v1039
  %v1049 = vpack.c.b16 %v1044, %v1043
  %v1050 = vpack.c.b16 %v1045, %v1045
  %v1051 = vpack.c.b16 %v1047, %v1046
  %v1052 = vpack.c.b16 %v1048, %v1048
  %1057 = vst [vmem:[#allocation2 + $0x60] sm:$0xff] %v1049
  %1058 = vst [vmem:[#allocation2 + $0x68] sm:$0xf] %v1050
  %1059 = vst [vmem:[#allocation2 + $0x6c] sm:$0xff] %v1051
  %1060 = vst [vmem:[#allocation2 + $0x74] sm:$0xf] %v1052
  %v1061 = vld [vmem:[#allocation2] sm:$0xff]
  %v1062 = vld [vmem:[#allocation2 + $0x8] sm:$0xf]
  %v1063 = vld [vmem:[#allocation2 + $0xc] sm:$0xff]
  %v1064 = vld [vmem:[#allocation2 + $0x14] sm:$0xf]
  %v1065 = vld [vmem:[#allocation2 + $0x18] sm:$0xff]
  %v1066 = vld [vmem:[#allocation2 + $0x20] sm:$0xf]
  %v1067 = vld [vmem:[#allocation2 + $0x24] sm:$0xff]
  %v1068 = vld [vmem:[#allocation2 + $0x2c] sm:$0xf]
  %v1069 = vld [vmem:[#allocation2 + $0x30] sm:$0xff]
  %v1070 = vld [vmem:[#allocation2 + $0x38] sm:$0xf]
  %v1071 = vld [vmem:[#allocation2 + $0x3c] sm:$0xff]
  %v1072 = vld [vmem:[#allocation2 + $0x44] sm:$0xf]
  %v1073 = vld [vmem:[#allocation2 + $0x48] sm:$0xff]
  %v1074 = vld [vmem:[#allocation2 + $0x50] sm:$0xf]
  %v1075 = vld [vmem:[#allocation2 + $0x54] sm:$0xff]
  %v1076 = vld [vmem:[#allocation2 + $0x5c] sm:$0xf]
  %v1077 = vld [vmem:[#allocation2 + $0x60] sm:$0xff]
  %v1078 = vld [vmem:[#allocation2 + $0x68] sm:$0xf]
  %v1079 = vld [vmem:[#allocation2 + $0x6c] sm:$0xff]
  %v1080 = vld [vmem:[#allocation2 + $0x74] sm:$0xf]
  %v1083 = vunpack.c.l.b16 %v36
  %v1084 = vunpack.c.l.b16 %v37
  %v1085 = vpack.c.b16 %v1084, %v1083
  %v1106 = vunpack.c.l.b16 %v1061
  %v1107 = vunpack.c.h.b16 %v1061
  %v1108 = vunpack.c.l.b16 %v1062
  %v1109 = vunpack.c.l.b16 %v1063
  %v1110 = vunpack.c.h.b16 %v1063
  %v1111 = vunpack.c.l.b16 %v1064
  %v1112 = vunpack.c.l.b16 %v1065
  %v1113 = vunpack.c.h.b16 %v1065
  %v1114 = vunpack.c.l.b16 %v1066
  %v1115 = vunpack.c.l.b16 %v1067
  %v1116 = vunpack.c.h.b16 %v1067
  %v1117 = vunpack.c.l.b16 %v1068
  %v1118 = vunpack.c.l.b16 %v1069
  %v1119 = vunpack.c.h.b16 %v1069
  %v1120 = vunpack.c.l.b16 %v1070
  %v1121 = vunpack.c.l.b16 %v1071
  %v1122 = vunpack.c.h.b16 %v1071
  %v1123 = vunpack.c.l.b16 %v1072
  %v1124 = vunpack.c.l.b16 %v1073
  %v1125 = vunpack.c.h.b16 %v1073
  %v1126 = vunpack.c.l.b16 %v1074
  %v1127 = vunpack.c.l.b16 %v1075
  %v1128 = vunpack.c.h.b16 %v1075
  %v1129 = vunpack.c.l.b16 %v1076
  %v1130 = vunpack.c.l.b16 %v1077
  %v1131 = vunpack.c.h.b16 %v1077
  %v1132 = vunpack.c.l.b16 %v1078
  %v1133 = vunpack.c.l.b16 %v1079
  %v1134 = vunpack.c.h.b16 %v1079
  %v1135 = vunpack.c.l.b16 %v1080
  %v1136 = vpack.c.b16 %v1109, %v1106
  %v1137 = vpack.c.b16 %v1110, %v1107
  %v1138 = vpack.c.b16 %v1111, %v1108
  %v1139 = vpack.c.b16 %v1115, %v1112
  %v1140 = vpack.c.b16 %v1116, %v1113
  %v1141 = vpack.c.b16 %v1117, %v1114
  %v1142 = vpack.c.b16 %v1121, %v1118
  %v1143 = vpack.c.b16 %v1122, %v1119
  %v1144 = vpack.c.b16 %v1123, %v1120
  %v1145 = vpack.c.b16 %v1127, %v1124
  %v1146 = vpack.c.b16 %v1128, %v1125
  %v1147 = vpack.c.b16 %v1129, %v1126
  %v1148 = vpack.c.b16 %v1133, %v1130
  %v1149 = vpack.c.b16 %v1134, %v1131
  %v1150 = vpack.c.b16 %v1135, %v1132
  %v1167 = vsel %vm349, %v1085, 0
  %1169 = vmatprep.subr.bf16.mxu0 0
  %1170 = vmatpush1.bf16.msra.mxu0 0
  %1171 = vmatprep.subr.bf16.mxu0 0
  %1172 = vmatpush1.bf16.msra.mxu0 0
  %1173 = vmatprep.subr.bf16.mxu0 0
  %1174 = vmatpush1.bf16.msra.mxu0 0
  %1175 = vmatprep.subr.bf16.mxu0 %v1149
  %1176 = vmatpush1.bf16.msra.mxu0 %v1148
  %1177 = vmatprep.subr.bf16.mxu0 %v1146
  %1178 = vmatpush1.bf16.msra.mxu0 %v1145
  %1179 = vmatprep.subr.bf16.mxu0 %v1143
  %1180 = vmatpush1.bf16.msra.mxu0 %v1142
  %1181 = vmatprep.subr.bf16.mxu0 %v1140
  %1182 = vmatpush1.bf16.msra.mxu0 %v1139
  %1183 = vmatprep.subr.bf16.mxu0 %v1137
  %1184 = vmatpush1.bf16.msra.mxu0 %v1136
  %1185 = vmatprep.subr.bf16.mxu0 0
  %1186 = vmatpush2.bf16.msra.mxu0 0
  %1187 = vmatprep.subr.bf16.mxu0 0
  %1188 = vmatpush2.bf16.msra.mxu0 0
  %1189 = vmatprep.subr.bf16.mxu0 0
  %1190 = vmatpush2.bf16.msra.mxu0 0
  %1191 = vmatprep.subr.bf16.mxu0 0
  %1192 = vmatpush2.bf16.msra.mxu0 0
  %1193 = vmatprep.subr.bf16.mxu0 0
  %1194 = vmatpush2.bf16.msra.mxu0 0
  %1195 = vmatprep.subr.bf16.mxu0 0
  %1196 = vmatpush2.bf16.msra.mxu0 0
  %1197 = vmatprep.subr.bf16.mxu0 0
  %1198 = vmatpush2.bf16.msra.mxu0 0
  %1199 = vmatprep.subr.bf16.mxu0 0
  %1200 = vmatpush2.bf16.msra.mxu0 0
  %1201 = vmatprep.mubr.bf16.mxu0 0
  %1202 = vmatmul.mubr.bf16.gmra.mxu0 %v1167
  %v1203 = vpop.f32.mrf.mxu0
  %v1204 = vadd.f32 0.0, %v1203
  %v1205 = vpop.f32.mrf.mxu0
  %v1206 = vadd.f32 0.0, %v1205
  %v1207 = vpop.f32.mrf.mxu0
  %v1208 = vadd.f32 0.0, %v1207
  %v1209 = vpop.f32.mrf.mxu0
  %v1210 = vadd.f32 0.0, %v1209
  %1211 = vdwg.mxu0
  %1212 = vmatprep.subr.bf16.mxu0 0
  %1213 = vmatpush1.bf16.msra.mxu0 0
  %1214 = vmatprep.subr.bf16.mxu0 0
  %1215 = vmatpush1.bf16.msra.mxu0 0
  %1216 = vmatprep.subr.bf16.mxu0 0
  %1217 = vmatpush1.bf16.msra.mxu0 0
  %1218 = vmatprep.subr.bf16.mxu0 0
  %1219 = vmatpush1.bf16.msra.mxu0 %v1150
  %1220 = vmatprep.subr.bf16.mxu0 0
  %1221 = vmatpush1.bf16.msra.mxu0 %v1147
  %1222 = vmatprep.subr.bf16.mxu0 0
  %1223 = vmatpush1.bf16.msra.mxu0 %v1144
  %1224 = vmatprep.subr.bf16.mxu0 0
  %1225 = vmatpush1.bf16.msra.mxu0 %v1141
  %1226 = vmatprep.subr.bf16.mxu0 0
  %1227 = vmatpush1.bf16.msra.mxu0 %v1138
  %1228 = vmatprep.subr.bf16.mxu0 0
  %1229 = vmatpush2.bf16.msra.mxu0 0
  %1230 = vmatprep.subr.bf16.mxu0 0
  %1231 = vmatpush2.bf16.msra.mxu0 0
  %1232 = vmatprep.subr.bf16.mxu0 0
  %1233 = vmatpush2.bf16.msra.mxu0 0
  %1234 = vmatprep.subr.bf16.mxu0 0
  %1235 = vmatpush2.bf16.msra.mxu0 0
  %1236 = vmatprep.subr.bf16.mxu0 0
  %1237 = vmatpush2.bf16.msra.mxu0 0
  %1238 = vmatprep.subr.bf16.mxu0 0
  %1239 = vmatpush2.bf16.msra.mxu0 0
  %1240 = vmatprep.subr.bf16.mxu0 0
  %1241 = vmatpush2.bf16.msra.mxu0 0
  %1242 = vmatprep.subr.bf16.mxu0 0
  %1243 = vmatpush2.bf16.msra.mxu0 0
  %1244 = vmatprep.mubr.bf16.mxu0 0
  %1245 = vmatmul.mubr.bf16.gmra.mxu0 %v1167
  %v1246 = vpop.f32.mrf.mxu0
  %v1247 = vadd.f32 0.0, %v1246
  %v1248 = vpop.f32.mrf.mxu0
  %v1249 = vpop.f32.mrf.mxu0
  %v1250 = vadd.f32 0.0, %v1249
  %v1251 = vpop.f32.mrf.mxu0
  %1252 = vdwg.mxu0
  %vm1253 = vcmp.gt.f32.partialorder %v1204, 0.0
  %vm1254 = vcmp.gt.f32.partialorder %v1206, 0.0
  %vm1255 = vcmp.gt.f32.partialorder %v1247, 0.0
  %vm1256 = vcmp.gt.f32.partialorder %v1208, 0.0
  %vm1257 = vcmp.gt.f32.partialorder %v1210, 0.0
  %vm1258 = vcmp.gt.f32.partialorder %v1250, 0.0
  %v1259 = vmul.f32 %v1204, 0.01
  %v1260 = vmul.f32 %v1206, 0.01
  %v1261 = vmul.f32 %v1247, 0.01
  %v1262 = vmul.f32 %v1208, 0.01
  %v1263 = vmul.f32 %v1210, 0.01
  %v1264 = vmul.f32 %v1250, 0.01
  %v1265 = vsel %vm1253, %v1204, %v1259
  %v1266 = vsel %vm1254, %v1206, %v1260
  %v1267 = vsel %vm1255, %v1247, %v1261
  %v1268 = vsel %vm1256, %v1208, %v1262
  %v1269 = vsel %vm1257, %v1210, %v1263
  %v1270 = vsel %vm1258, %v1250, %v1264
  %v1271 = vmul.f32 %v1265, %v20
  %v1272 = vmul.f32 %v1266, %v24
  %v1273 = vmul.f32 %v1267, %v28
  %v1274 = vmul.f32 %v1268, %v20
  %v1275 = vmul.f32 %v1269, %v24
  %v1276 = vmul.f32 %v1270, %v28
  %1277 = vrot.lane.b32.xlu0 %v1271, 2
  %v1278 = vpop.permute.xlu0 %1277
  %1279 = vrot.lane.b32.xlu0 %v1274, 2
  %v1280 = vpop.permute.xlu0 %1279
  %1281 = vrot.lane.b32.xlu0 %v1272, 2
  %v1282 = vpop.permute.xlu0 %1281
  %1283 = vrot.lane.b32.xlu0 %v1275, 2
  %v1284 = vpop.permute.xlu0 %1283
  %1285 = vrot.lane.b32.xlu0 %v1273, 2
  %v1286 = vpop.permute.xlu0 %1285
  %1287 = vrot.lane.b32.xlu0 %v1276, 2
  %v1288 = vpop.permute.xlu0 %1287
  %v1289 = vsel %vm60, %v1282, %v1286
  %v1290 = vsel %vm60, %v1284, %v1288
  %v1291 = vsel %vm60, %v1278, %v1282
  %v1292 = vsel %vm60, %v1280, %v1284
  %v1293 = vsel %vm60, %v1286, %v1278
  %v1294 = vsel %vm60, %v1288, %v1280
  %v1295 = vpack.c.bf16 %v1294, %v1293
  %v1296 = vpack.c.bf16 %v1292, %v1291
  %v1297 = vpack.c.bf16 %v1290, %v1289
  %v1301 = vunpack.c.l.b16 %v1295
  %v1302 = vunpack.c.l.b16 %v1296
  %v1303 = vunpack.c.l.b16 %v1297
  %v1304 = vunpack.c.h.b16 %v1295
  %v1305 = vunpack.c.h.b16 %v1296
  %v1306 = vunpack.c.h.b16 %v1297
  %v1307 = vpack.c.b16 %v1302, %v1301
  %v1308 = vpack.c.b16 %v1303, %v1303
  %v1309 = vpack.c.b16 %v1305, %v1304
  %v1310 = vpack.c.b16 %v1306, %v1306
  %1315 = vst [vmem:[#allocation2] sm:$0xff] %v1307
  %1316 = vst [vmem:[#allocation2 + $0x8] sm:$0xf] %v1308
  %1317 = vst [vmem:[#allocation2 + $0xc] sm:$0xff] %v1309
  %1318 = vst [vmem:[#allocation2 + $0x14] sm:$0xf] %v1310
  %1319 = vrot.lane.b32.xlu0 %v1271, 1
  %v1320 = vpop.permute.xlu0 %1319
  %1321 = vrot.lane.b32.xlu0 %v1274, 1
  %v1322 = vpop.permute.xlu0 %1321
  %1323 = vrot.lane.b32.xlu0 %v1272, 1
  %v1324 = vpop.permute.xlu0 %1323
  %1325 = vrot.lane.b32.xlu0 %v1275, 1
  %v1326 = vpop.permute.xlu0 %1325
  %1327 = vrot.lane.b32.xlu0 %v1273, 1
  %v1328 = vpop.permute.xlu0 %1327
  %1329 = vrot.lane.b32.xlu0 %v1276, 1
  %v1330 = vpop.permute.xlu0 %1329
  %v1331 = vsel %vm103, %v1324, %v1328
  %v1332 = vsel %vm103, %v1326, %v1330
  %v1333 = vsel %vm103, %v1320, %v1324
  %v1334 = vsel %vm103, %v1322, %v1326
  %v1335 = vsel %vm103, %v1328, %v1320
  %v1336 = vsel %vm103, %v1330, %v1322
  %v1337 = vpack.c.bf16 %v1336, %v1335
  %v1338 = vpack.c.bf16 %v1334, %v1333
  %v1339 = vpack.c.bf16 %v1332, %v1331
  %v1343 = vunpack.c.l.b16 %v1337
  %v1344 = vunpack.c.l.b16 %v1338
  %v1345 = vunpack.c.l.b16 %v1339
  %v1346 = vunpack.c.h.b16 %v1337
  %v1347 = vunpack.c.h.b16 %v1338
  %v1348 = vunpack.c.h.b16 %v1339
  %v1349 = vpack.c.b16 %v1344, %v1343
  %v1350 = vpack.c.b16 %v1345, %v1345
  %v1351 = vpack.c.b16 %v1347, %v1346
  %v1352 = vpack.c.b16 %v1348, %v1348
  %1357 = vst [vmem:[#allocation2 + $0x18] sm:$0xff] %v1349
  %1358 = vst [vmem:[#allocation2 + $0x20] sm:$0xf] %v1350
  %1359 = vst [vmem:[#allocation2 + $0x24] sm:$0xff] %v1351
  %1360 = vst [vmem:[#allocation2 + $0x2c] sm:$0xf] %v1352
  %v1361 = vpack.c.bf16 %v1274, %v1271
  %v1362 = vpack.c.bf16 %v1275, %v1272
  %v1363 = vpack.c.bf16 %v1276, %v1273
  %v1367 = vunpack.c.l.b16 %v1361
  %v1368 = vunpack.c.l.b16 %v1362
  %v1369 = vunpack.c.l.b16 %v1363
  %v1370 = vunpack.c.h.b16 %v1361
  %v1371 = vunpack.c.h.b16 %v1362
  %v1372 = vunpack.c.h.b16 %v1363
  %v1373 = vpack.c.b16 %v1368, %v1367
  %v1374 = vpack.c.b16 %v1369, %v1369
  %v1375 = vpack.c.b16 %v1371, %v1370
  %v1376 = vpack.c.b16 %v1372, %v1372
  %1381 = vst [vmem:[#allocation2 + $0x30] sm:$0xff] %v1373
  %1382 = vst [vmem:[#allocation2 + $0x38] sm:$0xf] %v1374
  %1383 = vst [vmem:[#allocation2 + $0x3c] sm:$0xff] %v1375
  %1384 = vst [vmem:[#allocation2 + $0x44] sm:$0xf] %v1376
  %1385 = vrot.lane.b32.xlu0 %v1271, 127
  %v1386 = vpop.permute.xlu0 %1385
  %1387 = vrot.lane.b32.xlu0 %v1274, 127
  %v1388 = vpop.permute.xlu0 %1387
  %1389 = vrot.lane.b32.xlu0 %v1272, 127
  %v1390 = vpop.permute.xlu0 %1389
  %1391 = vrot.lane.b32.xlu0 %v1275, 127
  %v1392 = vpop.permute.xlu0 %1391
  %1393 = vrot.lane.b32.xlu0 %v1273, 127
  %v1394 = vpop.permute.xlu0 %1393
  %1395 = vrot.lane.b32.xlu0 %v1276, 127
  %v1396 = vpop.permute.xlu0 %1395
  %v1397 = vsel %vm170, %v1390, %v1394
  %v1398 = vsel %vm170, %v1392, %v1396
  %v1399 = vsel %vm170, %v1386, %v1390
  %v1400 = vsel %vm170, %v1388, %v1392
  %v1401 = vsel %vm170, %v1394, %v1386
  %v1402 = vsel %vm170, %v1396, %v1388
  %v1403 = vpack.c.bf16 %v1400, %v1399
  %v1404 = vpack.c.bf16 %v1398, %v1397
  %v1405 = vpack.c.bf16 %v1402, %v1401
  %v1409 = vunpack.c.l.b16 %v1403
  %v1410 = vunpack.c.l.b16 %v1404
  %v1411 = vunpack.c.l.b16 %v1405
  %v1412 = vunpack.c.h.b16 %v1403
  %v1413 = vunpack.c.h.b16 %v1404
  %v1414 = vunpack.c.h.b16 %v1405
  %v1415 = vpack.c.b16 %v1410, %v1409
  %v1416 = vpack.c.b16 %v1411, %v1411
  %v1417 = vpack.c.b16 %v1413, %v1412
  %v1418 = vpack.c.b16 %v1414, %v1414
  %1423 = vst [vmem:[#allocation2 + $0x48] sm:$0xff] %v1415
  %1424 = vst [vmem:[#allocation2 + $0x50] sm:$0xf] %v1416
  %1425 = vst [vmem:[#allocation2 + $0x54] sm:$0xff] %v1417
  %1426 = vst [vmem:[#allocation2 + $0x5c] sm:$0xf] %v1418
  %1427 = vrot.lane.b32.xlu0 %v1271, 126
  %v1428 = vpop.permute.xlu0 %1427
  %1429 = vrot.lane.b32.xlu0 %v1274, 126
  %v1430 = vpop.permute.xlu0 %1429
  %1431 = vrot.lane.b32.xlu0 %v1272, 126
  %v1432 = vpop.permute.xlu0 %1431
  %1433 = vrot.lane.b32.xlu0 %v1275, 126
  %v1434 = vpop.permute.xlu0 %1433
  %1435 = vrot.lane.b32.xlu0 %v1273, 126
  %v1436 = vpop.permute.xlu0 %1435
  %1437 = vrot.lane.b32.xlu0 %v1276, 126
  %v1438 = vpop.permute.xlu0 %1437
  %v1439 = vsel %vm213, %v1432, %v1436
  %v1440 = vsel %vm213, %v1434, %v1438
  %v1441 = vsel %vm213, %v1428, %v1432
  %v1442 = vsel %vm213, %v1430, %v1434
  %v1443 = vsel %vm213, %v1436, %v1428
  %v1444 = vsel %vm213, %v1438, %v1430
  %v1445 = vpack.c.bf16 %v1442, %v1441
  %v1446 = vpack.c.bf16 %v1440, %v1439
  %v1447 = vpack.c.bf16 %v1444, %v1443
  %v1451 = vunpack.c.l.b16 %v1445
  %v1452 = vunpack.c.l.b16 %v1446
  %v1453 = vunpack.c.l.b16 %v1447
  %v1454 = vunpack.c.h.b16 %v1445
  %v1455 = vunpack.c.h.b16 %v1446
  %v1456 = vunpack.c.h.b16 %v1447
  %v1457 = vpack.c.b16 %v1452, %v1451
  %v1458 = vpack.c.b16 %v1453, %v1453
  %v1459 = vpack.c.b16 %v1455, %v1454
  %v1460 = vpack.c.b16 %v1456, %v1456
  %1465 = vst [vmem:[#allocation2 + $0x60] sm:$0xff] %v1457
  %1466 = vst [vmem:[#allocation2 + $0x68] sm:$0xf] %v1458
  %1467 = vst [vmem:[#allocation2 + $0x6c] sm:$0xff] %v1459
  %1468 = vst [vmem:[#allocation2 + $0x74] sm:$0xf] %v1460
  %v1469 = vld [vmem:[#allocation2] sm:$0xff]
  %v1470 = vld [vmem:[#allocation2 + $0x8] sm:$0xf]
  %v1471 = vld [vmem:[#allocation2 + $0xc] sm:$0xff]
  %v1472 = vld [vmem:[#allocation2 + $0x14] sm:$0xf]
  %v1473 = vld [vmem:[#allocation2 + $0x18] sm:$0xff]
  %v1474 = vld [vmem:[#allocation2 + $0x20] sm:$0xf]
  %v1475 = vld [vmem:[#allocation2 + $0x24] sm:$0xff]
  %v1476 = vld [vmem:[#allocation2 + $0x2c] sm:$0xf]
  %v1477 = vld [vmem:[#allocation2 + $0x30] sm:$0xff]
  %v1478 = vld [vmem:[#allocation2 + $0x38] sm:$0xf]
  %v1479 = vld [vmem:[#allocation2 + $0x3c] sm:$0xff]
  %v1480 = vld [vmem:[#allocation2 + $0x44] sm:$0xf]
  %v1481 = vld [vmem:[#allocation2 + $0x48] sm:$0xff]
  %v1482 = vld [vmem:[#allocation2 + $0x50] sm:$0xf]
  %v1483 = vld [vmem:[#allocation2 + $0x54] sm:$0xff]
  %v1484 = vld [vmem:[#allocation2 + $0x5c] sm:$0xf]
  %v1485 = vld [vmem:[#allocation2 + $0x60] sm:$0xff]
  %v1486 = vld [vmem:[#allocation2 + $0x68] sm:$0xf]
  %v1487 = vld [vmem:[#allocation2 + $0x6c] sm:$0xff]
  %v1488 = vld [vmem:[#allocation2 + $0x74] sm:$0xf]
  %v1491 = vunpack.c.l.b16 %v38
  %v1492 = vunpack.c.l.b16 %v39
  %v1493 = vpack.c.b16 %v1492, %v1491
  %v1514 = vunpack.c.l.b16 %v1469
  %v1515 = vunpack.c.h.b16 %v1469
  %v1516 = vunpack.c.l.b16 %v1470
  %v1517 = vunpack.c.l.b16 %v1471
  %v1518 = vunpack.c.h.b16 %v1471
  %v1519 = vunpack.c.l.b16 %v1472
  %v1520 = vunpack.c.l.b16 %v1473
  %v1521 = vunpack.c.h.b16 %v1473
  %v1522 = vunpack.c.l.b16 %v1474
  %v1523 = vunpack.c.l.b16 %v1475
  %v1524 = vunpack.c.h.b16 %v1475
  %v1525 = vunpack.c.l.b16 %v1476
  %v1526 = vunpack.c.l.b16 %v1477
  %v1527 = vunpack.c.h.b16 %v1477
  %v1528 = vunpack.c.l.b16 %v1478
  %v1529 = vunpack.c.l.b16 %v1479
  %v1530 = vunpack.c.h.b16 %v1479
  %v1531 = vunpack.c.l.b16 %v1480
  %v1532 = vunpack.c.l.b16 %v1481
  %v1533 = vunpack.c.h.b16 %v1481
  %v1534 = vunpack.c.l.b16 %v1482
  %v1535 = vunpack.c.l.b16 %v1483
  %v1536 = vunpack.c.h.b16 %v1483
  %v1537 = vunpack.c.l.b16 %v1484
  %v1538 = vunpack.c.l.b16 %v1485
  %v1539 = vunpack.c.h.b16 %v1485
  %v1540 = vunpack.c.l.b16 %v1486
  %v1541 = vunpack.c.l.b16 %v1487
  %v1542 = vunpack.c.h.b16 %v1487
  %v1543 = vunpack.c.l.b16 %v1488
  %v1544 = vpack.c.b16 %v1517, %v1514
  %v1545 = vpack.c.b16 %v1518, %v1515
  %v1546 = vpack.c.b16 %v1519, %v1516
  %v1547 = vpack.c.b16 %v1523, %v1520
  %v1548 = vpack.c.b16 %v1524, %v1521
  %v1549 = vpack.c.b16 %v1525, %v1522
  %v1550 = vpack.c.b16 %v1529, %v1526
  %v1551 = vpack.c.b16 %v1530, %v1527
  %v1552 = vpack.c.b16 %v1531, %v1528
  %v1553 = vpack.c.b16 %v1535, %v1532
  %v1554 = vpack.c.b16 %v1536, %v1533
  %v1555 = vpack.c.b16 %v1537, %v1534
  %v1556 = vpack.c.b16 %v1541, %v1538
  %v1557 = vpack.c.b16 %v1542, %v1539
  %v1558 = vpack.c.b16 %v1543, %v1540
  %v1575 = vsel %vm349, %v1493, 0
  %1577 = vmatprep.subr.bf16.mxu0 0
  %1578 = vmatpush1.bf16.msra.mxu0 0
  %1579 = vmatprep.subr.bf16.mxu0 0
  %1580 = vmatpush1.bf16.msra.mxu0 0
  %1581 = vmatprep.subr.bf16.mxu0 0
  %1582 = vmatpush1.bf16.msra.mxu0 0
  %1583 = vmatprep.subr.bf16.mxu0 %v1557
  %1584 = vmatpush1.bf16.msra.mxu0 %v1556
  %1585 = vmatprep.subr.bf16.mxu0 %v1554
  %1586 = vmatpush1.bf16.msra.mxu0 %v1553
  %1587 = vmatprep.subr.bf16.mxu0 %v1551
  %1588 = vmatpush1.bf16.msra.mxu0 %v1550
  %1589 = vmatprep.subr.bf16.mxu0 %v1548
  %1590 = vmatpush1.bf16.msra.mxu0 %v1547
  %1591 = vmatprep.subr.bf16.mxu0 %v1545
  %1592 = vmatpush1.bf16.msra.mxu0 %v1544
  %1593 = vmatprep.subr.bf16.mxu0 0
  %1594 = vmatpush2.bf16.msra.mxu0 0
  %1595 = vmatprep.subr.bf16.mxu0 0
  %1596 = vmatpush2.bf16.msra.mxu0 0
  %1597 = vmatprep.subr.bf16.mxu0 0
  %1598 = vmatpush2.bf16.msra.mxu0 0
  %1599 = vmatprep.subr.bf16.mxu0 0
  %1600 = vmatpush2.bf16.msra.mxu0 0
  %1601 = vmatprep.subr.bf16.mxu0 0
  %1602 = vmatpush2.bf16.msra.mxu0 0
  %1603 = vmatprep.subr.bf16.mxu0 0
  %1604 = vmatpush2.bf16.msra.mxu0 0
  %1605 = vmatprep.subr.bf16.mxu0 0
  %1606 = vmatpush2.bf16.msra.mxu0 0
  %1607 = vmatprep.subr.bf16.mxu0 0
  %1608 = vmatpush2.bf16.msra.mxu0 0
  %1609 = vmatprep.mubr.bf16.mxu0 0
  %1610 = vmatmul.mubr.bf16.gmra.mxu0 %v1575
  %v1611 = vpop.f32.mrf.mxu0
  %v1612 = vadd.f32 0.0, %v1611
  %v1613 = vpop.f32.mrf.mxu0
  %v1614 = vadd.f32 0.0, %v1613
  %v1615 = vpop.f32.mrf.mxu0
  %v1616 = vpop.f32.mrf.mxu0
  %1617 = vdwg.mxu0
  %1618 = vmatprep.subr.bf16.mxu0 0
  %1619 = vmatpush1.bf16.msra.mxu0 0
  %1620 = vmatprep.subr.bf16.mxu0 0
  %1621 = vmatpush1.bf16.msra.mxu0 0
  %1622 = vmatprep.subr.bf16.mxu0 0
  %1623 = vmatpush1.bf16.msra.mxu0 0
  %1624 = vmatprep.subr.bf16.mxu0 0
  %1625 = vmatpush1.bf16.msra.mxu0 %v1558
  %1626 = vmatprep.subr.bf16.mxu0 0
  %1627 = vmatpush1.bf16.msra.mxu0 %v1555
  %1628 = vmatprep.subr.bf16.mxu0 0
  %1629 = vmatpush1.bf16.msra.mxu0 %v1552
  %1630 = vmatprep.subr.bf16.mxu0 0
  %1631 = vmatpush1.bf16.msra.mxu0 %v1549
  %1632 = vmatprep.subr.bf16.mxu0 0
  %1633 = vmatpush1.bf16.msra.mxu0 %v1546
  %1634 = vmatprep.subr.bf16.mxu0 0
  %1635 = vmatpush2.bf16.msra.mxu0 0
  %1636 = vmatprep.subr.bf16.mxu0 0
  %1637 = vmatpush2.bf16.msra.mxu0 0
  %1638 = vmatprep.subr.bf16.mxu0 0
  %1639 = vmatpush2.bf16.msra.mxu0 0
  %1640 = vmatprep.subr.bf16.mxu0 0
  %1641 = vmatpush2.bf16.msra.mxu0 0
  %1642 = vmatprep.subr.bf16.mxu0 0
  %1643 = vmatpush2.bf16.msra.mxu0 0
  %1644 = vmatprep.subr.bf16.mxu0 0
  %1645 = vmatpush2.bf16.msra.mxu0 0
  %1646 = vmatprep.subr.bf16.mxu0 0
  %1647 = vmatpush2.bf16.msra.mxu0 0
  %1648 = vmatprep.subr.bf16.mxu0 0
  %1649 = vmatpush2.bf16.msra.mxu0 0
  %1650 = vmatprep.mubr.bf16.mxu0 0
  %1651 = vmatmul.mubr.bf16.gmra.mxu0 %v1575
  %v1652 = vpop.f32.mrf.mxu0
  %v1653 = vadd.f32 0.0, %v1652
  %v1654 = vpop.f32.mrf.mxu0
  %v1655 = vpop.f32.mrf.mxu0
  %v1656 = vpop.f32.mrf.mxu0
  %1657 = vdwg.mxu0
  %vm1658 = vcmp.gt.f32.partialorder %v1612, 0.0
  %vm1659 = vcmp.gt.f32.partialorder %v1614, 0.0
  %vm1660 = vcmp.gt.f32.partialorder %v1653, 0.0
  %v1661 = vmul.f32 %v1612, 0.01
  %v1662 = vmul.f32 %v1614, 0.01
  %v1663 = vmul.f32 %v1653, 0.01
  %v1664 = vsel %vm1658, %v1612, %v1661
  %v1665 = vsel %vm1659, %v1614, %v1662
  %v1666 = vsel %vm1660, %v1653, %v1663
  %v1670 = vcombine.low %v1664, %v1665
  %v1672 = vunpack.c.l.s4 1966171168
  %v1673 = vunpack.c.0.s8 %v1672
  %v1674 = vlaneseq
  %v1675 = vshrl.u32 %v1674, 7
  %v1676 = vsub.s32 %v1673, %v1675
  %v1677 = vrot.slane %v1670, %v1676
  %v1679 = vunpack.c.l.s4 1966171168
  %v1680 = vunpack.c.0.s8 %v1679
  %v1681 = vlaneseq
  %v1682 = vshrl.u32 %v1681, 7
  %v1683 = vsub.s32 %v1680, %v1682
  %v1684 = vrot.slane %v1666, %v1683
  %v1685 = vcombine.low %v1677, %v1684
  %v1687 = vunpack.c.l.s4 1966171168
  %v1688 = vunpack.c.0.s8 %v1687
  %v1689 = vlaneseq
  %v1690 = vshrl.u32 %v1689, 7
  %v1691 = vsub.s32 %v1688, %v1690
  %v1692 = vrot.slane %v1685, %v1691
  %v1694 = vlaneseq
  %vm1695 = vcmp.ge.s32.totalorder %v1694, 0
  %vm1696 = vcmp.lt.s32.totalorder %v1694, 384
  %vm1697 = vmand %vm1695, %vm1696
  %1698 = vst.msk [vmem:[%s3] sm:$0x7] %vm1697, %v1692
  // Predicated region
  $region14: #{conv1d_small_pallas.1} parent=0 // pred_check
    _
  $region15: #{conv1d_small_pallas.1} parent=0 // pred_check_branch
    %1700 = sbr.rel (0) target = $region17
  $region16: #{conv1d_small_pallas.1} parent=0 // pred_region
    _
  $region17: #{conv1d_small_pallas.1} parent=0 // pred_fallthru
    _
  // Predicated region
  $region18: #{conv1d_small_pallas.1} parent=0 // pred_check
    _
  $region19: #{conv1d_small_pallas.1} parent=0 // pred_check_branch
    %1702 = sbr.rel (0) target = $region21
  $region20: #{conv1d_small_pallas.1} parent=0 // pred_region
    _
  $region21: #{conv1d_small_pallas.1} parent=0 // pred_fallthru
    _

</llo_original>
